<compile_context>
chip_gen: v5e
topology: v5e:2x2
jax: 0.10.0
libtpu: 0.0.40
codegen_flags: <defaults>
</compile_context>

<pallas_src>
import jax
import jax.numpy as jnp
from jax import lax
from jax.experimental import pallas as pl
from jax.experimental.pallas import tpu as pltpu

# ----------------------------------------------------------------------------
# Config consistent with UtteranceLevelProsodyEncoder.__init__ (small shapes)
# ----------------------------------------------------------------------------
NUM_MELS = 8
REF_ENC_FILTERS = [8, 8, 16]
REF_ENC_SIZE = 3
REF_ENC_STRIDES = [2, 2]            # module uses strides = [1] + ref_enc_strides
REF_ENC_GRU_SIZE = 16
N_HIDDEN = 32                       # E
BOTTLENECK_SIZE_U = 32
TOKEN_NUM = 8
DROPOUT = 0.5                       # inference -> identity

B = 2
T = 24
LEAKY_SLOPE = 0.3
IN_EPS = 1e-5

KS = REF_ENC_SIZE
PAD = KS // 2
GRU_H = REF_ENC_GRU_SIZE
E = N_HIDDEN
E2 = E // 2


def _make_layer_dims():
    filters = [NUM_MELS] + REF_ENC_FILTERS
    strides = [1] + REF_ENC_STRIDES
    dims = []
    length = T
    for i in range(len(REF_ENC_FILTERS)):
        cin = filters[i] + (2 if i == 0 else 0)    # CoordConv1d(with_r=True): +coord,+r
        cout = filters[i + 1]
        s = strides[i]
        l_out = (length - KS + 2 * PAD) // s + 1
        dims.append((cin, cout, s, length, l_out))
        length = l_out
    return dims


LAYER_DIMS = _make_layer_dims()             # (cin, cout, stride, t_in, t_out) per layer
N_LAYERS = len(LAYER_DIMS)
T2 = LAYER_DIMS[-1][4]                      # time length after the conv stack (= 6)
C_LAST = LAYER_DIMS[-1][1]
STRIDE_PROD = 1
for _d in LAYER_DIMS:
    STRIDE_PROD *= _d[2]                    # = 4; lens2 > t  <=>  lens > STRIDE_PROD*t

# The last conv layer's downsample selection also reorders to time-major for the GRU.
assert LAYER_DIMS[-1][2] > 1, "last conv layer must be strided (config has strides 2,2)"

ATTN_SCALE = 1.0 / float(E) ** 0.5          # STL key_dim = d_k = E


def _r8(n):
    return ((n + 7) // 8) * 8


# ----------------------------------------------------------------------------
# Single parameter+constant slab layout (8-row aligned sections)
# ----------------------------------------------------------------------------
SLAB_W = 64                                 # widest section needs 48 lanes
_SECTIONS = {}
_SLAB_ROWS = 0


def _alloc(name, nrows, ncols):
    global _SLAB_ROWS
    assert ncols <= SLAB_W
    _SECTIONS[name] = (_SLAB_ROWS, nrows, ncols)
    _SLAB_ROWS += _r8(nrows)


_alloc("prep", B * T, 4)                    # cols: xx, rr, t_idx, b_idx
for _li, (_cin, _cout, _s, _tin, _tout) in enumerate(LAYER_DIMS):
    _alloc(f"shmask{_li}", B * _tin, 2)     # valid masks for taps -1 / +1
    _alloc(f"w{_li}", KS * _cin, _cout)     # im2col conv weight
    _alloc(f"p{_li}", 3, _cout)             # conv bias, IN gamma, IN beta
    if _s > 1:
        _alloc(f"sel{_li}", B * _tout, B * _tin)   # stride-s row selection
    _alloc(f"red{_li}", B, B * _tout)       # one-hot reduce (1/t_out folded)
    _alloc(f"exp{_li}", B * _tout, B)       # one-hot expand
_alloc("gru_wi", C_LAST, 3 * GRU_H)
_alloc("gru_wh", GRU_H, 3 * GRU_H)
_alloc("gru_b", 2, 3 * GRU_H)               # row0 = b_ih, row1 = b_hh
_alloc("wpq", GRU_H, E)                     # encoder_prj folded into STL W_query
_alloc("head_b", 2, max(E, BOTTLENECK_SIZE_U))   # row0 = bq, row1 = bottleneck bias
_alloc("kt", E, TOKEN_NUM)                  # (tanh(embed) @ Wk^T)^T
_alloc("v", TOKEN_NUM, E)                   # tanh(embed) @ Wv^T
_alloc("wb", E, BOTTLENECK_SIZE_U)          # bottleneck weight^T


# ----------------------------------------------------------------------------
# The fused kernel
# ----------------------------------------------------------------------------
def _fused_kernel(x_ref, lens_ref, slab_ref, out_ref):
    f32 = jnp.float32

    def rd(name):
        off, r, c = _SECTIONS[name]
        return slab_ref[off:off + r, 0:c]

    # ---- input prep: masked_fill by length + CoordConv(rank=1, with_r=True) --------
    prep = rd("prep")                                 # [B*T, 4]: xx, rr, t_idx, b_idx
    xx = prep[:, 0:1]
    rr = prep[:, 1:2]
    t_idx = prep[:, 2:3]
    b_idx = prep[:, 3:4]
    lens_row = jnp.zeros((B * T, 1), f32)
    for bb in range(B):                               # mel_lens are f32 scalars in SMEM
        lens_row = jnp.where(b_idx == float(bb), lens_ref[bb], lens_row)
    x = jnp.where(t_idx < lens_row, x_ref[...], 0.0)  # x.masked_fill(mask, 0)
    x = jnp.concatenate([x, xx, rr], axis=1)          # [B*T, NUM_MELS + 2]

    # ---- conv -> leaky_relu(0.3) -> InstanceNorm1d stack ----------------------------
    for li, (cin, cout, stride, t_in, t_out) in enumerate(LAYER_DIMS):
        bt_in = B * t_in

        # im2col via +-1 tap shifts with precomputed boundary masks (full resolution)
        shm = rd(f"shmask{li}")                       # [bt_in, 2]
        zrow = jnp.zeros((1, cin), f32)
        x_m1 = jnp.concatenate([zrow, x[0:bt_in - 1, :]], axis=0) * shm[:, 0:1]
        x_p1 = jnp.concatenate([x[1:bt_in, :], zrow], axis=0) * shm[:, 1:2]
        xcol = jnp.concatenate([x_m1, x, x_p1], axis=1)                 # [bt_in, 3*cin]
        y = jnp.dot(xcol, rd(f"w{li}"), preferred_element_type=f32)     # [bt_in, cout]

        if stride > 1:
            # strided conv: keep every stride-th output row with ONE precomputed
            # selection matmul (no scratch, no vst->vld).  The last layer's selection
            # also reorders to time-major for the GRU.
            y = jnp.dot(rd(f"sel{li}"), y, preferred_element_type=f32)  # [bt_out, cout]

        p = rd(f"p{li}")                              # [3, cout]: bias, gamma, beta
        y = y + p[0:1, :]
        y = jnp.where(y >= 0.0, y, LEAKY_SLOPE * y)   # leaky_relu(0.3)

        # InstanceNorm1d (biased var per (batch, channel) over time), 3 MXU pushes:
        #   mu, E[y^2] via thin one-hot reduces; one combined [scale|shift] expand.
        red = rd(f"red{li}")                          # [B, bt_out]  (1/t_out folded)
        mu = jnp.dot(red, y, preferred_element_type=f32)                # [B, cout]
        ey2 = jnp.dot(red, y * y, preferred_element_type=f32)           # [B, cout]
        var = jnp.maximum(ey2 - mu * mu, 0.0)         # clamp tiny negative cancellation
        inv_std = lax.rsqrt(var + IN_EPS)
        scale = p[1:2, :] * inv_std                                     # [B, cout]
        shift = p[2:3, :] - mu * scale
        ss = jnp.dot(rd(f"exp{li}"), jnp.concatenate([scale, shift], axis=1),
                     preferred_element_type=f32)                        # [bt_out, 2c]
        x = y * ss[:, 0:cout] + ss[:, cout:2 * cout]

    # x is now [B*T2, C_LAST], TIME-MAJOR (row = t*B + b)

    # ---- GRU: final hidden state == "memory" of the packed-sequence GRU -------------
    wh = rd("gru_wh")                                 # [H, 3H]
    gb = rd("gru_b")
    # hoisted input projection: one matmul for all timesteps, kept in vregs
    gi = jnp.dot(x, rd("gru_wi"), preferred_element_type=f32) + gb[0:1, :]  # [B*T2, 3H]
    bh = gb[1:2, :]

    b_col = lax.broadcasted_iota(jnp.int32, (B, 1), 0)
    lens_col = jnp.zeros((B, 1), f32)
    for bb in range(B):
        lens_col = jnp.where(b_col == bb, lens_ref[bb], lens_col)

    h = jnp.zeros((B, GRU_H), f32)
    for tt in range(T2):                              # fully unrolled (T2 = 6, static)
        gi_t = gi[tt * B:(tt + 1) * B, :]             # contiguous [B, 3H] (time-major)
        gh = jnp.dot(h, wh, preferred_element_type=f32) + bh
        rz = jax.nn.sigmoid(gi_t[:, 0:2 * GRU_H] + gh[:, 0:2 * GRU_H])  # fused r,z
        r = rz[:, 0:GRU_H]
        z = rz[:, GRU_H:2 * GRU_H]
        n = jnp.tanh(gi_t[:, 2 * GRU_H:3 * GRU_H] + r * gh[:, 2 * GRU_H:3 * GRU_H])
        h_new = (1.0 - z) * n + z * h
        # packed-sequence semantics: update only while t < ceil(ceil(len/2)/2),
        # i.e. len > STRIDE_PROD * t (no integer division needed).
        h = jnp.where(lens_col > float(STRIDE_PROD * tt), h_new, h)

    # ---- head: (encoder_prj o W_query) folded, STL attention, bottleneck ------------
    hb = rd("head_b")
    q = jnp.dot(h, rd("wpq"), preferred_element_type=f32) + hb[0:1, 0:E]      # [B, E]
    scores = jnp.dot(q, rd("kt"), preferred_element_type=f32) * ATTN_SCALE    # [B, tok]
    # NOTE: the original feeds the 3-D GRU memory [1,B,gru] through STL, so its
    # softmax(dim=3) lands on the *batch* axis of the [1,1,1,B,token] score tensor.
    m = jnp.max(scores, axis=0, keepdims=True)
    ev = jnp.exp(scores - m)
    sm = ev / jnp.sum(ev, axis=0, keepdims=True)      # exact divide (parity with torch)
    attn = jnp.dot(sm, rd("v"), preferred_element_type=f32)                   # [B, E]
    res = (jnp.dot(attn, rd("wb"), preferred_element_type=f32)
           + hb[1:2, 0:BOTTLENECK_SIZE_U])                                    # [B, bneck]
    # nn.Dropout: inference mode -> identity.
    out_ref[...] = res


# ----------------------------------------------------------------------------
# Wrapper (single pallas_call, 3 operands, no scratch)
# ----------------------------------------------------------------------------
@jax.jit
def utterance_level_prosody_encoder(mels, mel_lens, slab):
    """mels: [B, NUM_MELS, T] f32; mel_lens: [B] int (max(mel_lens) must equal T)."""
    # Only host-side glue: present the mel input time-major ([B*T, C]) so the fused
    # kernel's convs/GRU read a lane-dense slab (XLA fuses this into the input copy).
    x_tm = jnp.transpose(mels, (0, 2, 1)).reshape(B * T, NUM_MELS)

    out2d = pl.pallas_call(
        _fused_kernel,
        out_shape=jax.ShapeDtypeStruct((B, BOTTLENECK_SIZE_U), jnp.float32),
        in_specs=[
            pl.BlockSpec(memory_space=pltpu.MemorySpace.VMEM),      # mels (time-major)
            pl.BlockSpec(memory_space=pltpu.MemorySpace.SMEM),      # mel_lens (f32)
            pl.BlockSpec(memory_space=pltpu.MemorySpace.VMEM),      # packed param slab
        ],
        out_specs=pl.BlockSpec(memory_space=pltpu.MemorySpace.VMEM),
    )(x_tm, mel_lens.astype(jnp.float32), slab)

    # out.view((-1, 1, out.shape[3])) on the [1,1,B,bneck] bottleneck output
    return out2d[:, None, :]                                        # [B, 1, bottleneck]


# ----------------------------------------------------------------------------
# Deterministic synthetic parameters + precomputed constants, packed into ONE slab
# ----------------------------------------------------------------------------
def make_params(key):
    keys = iter(jax.random.split(key, 32))

    def nrm(shape, scale=0.2):
        return scale * jax.random.normal(next(keys), shape, dtype=jnp.float32)

    slab = jnp.zeros((_SLAB_ROWS, SLAB_W), jnp.float32)

    def put(slab, name, val):
        off, r, c = _SECTIONS[name]
        return slab.at[off:off + r, 0:c].set(
            jnp.asarray(val, jnp.float32).reshape(r, c))

    # --- input-independent constants (hoisted from the kernel) -----------------------
    t_idx = jnp.tile(jnp.arange(T, dtype=jnp.float32), B)
    b_idx = jnp.repeat(jnp.arange(B, dtype=jnp.float32), T)
    xx = t_idx * (2.0 / float(T - 1)) - 1.0                 # CoordConv coord channel
    rr = jnp.abs(xx - 0.5)                                  # sqrt((xx-0.5)^2)
    slab = put(slab, "prep", jnp.stack([xx, rr, t_idx, b_idx], axis=1))

    for li, (cin, cout, stride, t_in, t_out) in enumerate(LAYER_DIMS):
        tl = jnp.tile(jnp.arange(t_in), B)                  # time within batch segment
        shmask = jnp.stack([(tl >= 1).astype(jnp.float32),            # tap -1 valid
                            (tl <= t_in - 2).astype(jnp.float32)],    # tap +1 valid
                           axis=1)
        slab = put(slab, f"shmask{li}", shmask)

        # conv weight (torch [cout, cin, ks]) -> im2col [(k, cin), cout]
        w = nrm((cout, cin, KS))
        slab = put(slab, f"w{li}", jnp.transpose(w, (2, 1, 0)).reshape(KS * cin, cout))
        pmat = jnp.stack([nrm((cout,), 0.1),                # conv bias
                          1.0 + nrm((cout,), 0.1),          # InstanceNorm weight
                          nrm((cout,), 0.1)], axis=0)       # InstanceNorm bias
        slab = put(slab, f"p{li}", pmat)

        time_major = (li == N_LAYERS - 1)                   # last layer feeds the GRU
        rows = jnp.arange(B * t_out)
        if time_major:
            b_of, t_of = rows % B, rows // B
        else:
            b_of, t_of = rows // t_out, rows % t_out
        exp_oh = (b_of[:, None] == jnp.arange(B)[None, :]).astype(jnp.float32)
        slab = put(slab, f"exp{li}", exp_oh)
        slab = put(slab, f"red{li}", exp_oh.T / float(t_out))
        if stride > 1:
            src = b_of * t_in + stride * t_of               # full-res row to keep
            sel = (src[:, None] == jnp.arange(B * t_in)[None, :]).astype(jnp.float32)
            slab = put(slab, f"sel{li}", sel)

    # --- GRU: gates (r|z|n) fused into [., 3H] slabs ----------------------------------
    w_ih = nrm((3 * GRU_H, C_LAST))                         # torch weight_ih_l0
    w_hh = nrm((3 * GRU_H, GRU_H))                          # torch weight_hh_l0
    b_ih = nrm((3 * GRU_H,), 0.1)
    b_hh = nrm((3 * GRU_H,), 0.1)
    slab = put(slab, "gru_wi", w_ih.T)
    slab = put(slab, "gru_wh", w_hh.T)
    slab = put(slab, "gru_b", jnp.stack([b_ih, b_hh], axis=0))

    # --- head: encoder_prj folded into W_query; K/V precomputed (input independent) --
    wp = nrm((E2, GRU_H))                                   # encoder_prj.weight
    bp = nrm((E2,), 0.1)
    embed = 0.5 * jax.random.normal(next(keys), (TOKEN_NUM, E), dtype=jnp.float32)
    wq = nrm((E, E2))                                       # W_query (no bias)
    wk = nrm((E, E))                                        # W_key
    wv = nrm((E, E))                                        # W_value
    wbt = nrm((BOTTLENECK_SIZE_U, E))                       # encoder_bottleneck.weight
    bbott = nrm((BOTTLENECK_SIZE_U,), 0.1)

    slab = put(slab, "wpq", wp.T @ wq.T)                    # [gru, E]
    hb = jnp.zeros((2, max(E, BOTTLENECK_SIZE_U)), jnp.float32)
    hb = hb.at[0, :E].set((bp[None, :] @ wq.T)[0])
    hb = hb.at[1, :BOTTLENECK_SIZE_U].set(bbott)
    slab = put(slab, "head_b", hb)
    keys_soft = jnp.tanh(embed)                             # [token, E]
    slab = put(slab, "kt", (keys_soft @ wk.T).T)            # [E, token]
    slab = put(slab, "v", keys_soft @ wv.T)                 # [token, E]
    slab = put(slab, "wb", wbt.T)                           # [E, bneck]
    return slab


if __name__ == "__main__":
    key = jax.random.PRNGKey(0)
    k_mel, k_par = jax.random.split(key)
    mels = jax.random.normal(k_mel, (B, NUM_MELS, T), dtype=jnp.float32)
    mel_lens = jnp.array([T, 17], dtype=jnp.int32)
    # The reference module implicitly requires max(mel_lens) == T.
    assert int(jnp.max(mel_lens)) == T
    params = make_params(k_par)

    out = utterance_level_prosody_encoder(mels, mel_lens, params)
    out = jax.block_until_ready(out)
    assert out.shape == (B, 1, BOTTLENECK_SIZE_U), out.shape
    assert bool(jnp.all(jnp.isfinite(out)))
    print("KERNEL_OK")
</pallas_src>

<mosaic_0001>
module attributes {stable_mosaic.version = 11 : i64} {
  func.func @_fused_kernel(%arg0: memref<48x8xf32, #tpu.memory_space<vmem>>, %arg1: memref<2xf32, #tpu.memory_space<smem>>, %arg2: memref<560x64xf32, #tpu.memory_space<vmem>>, %arg3: memref<2x32xf32, #tpu.memory_space<vmem>>) attributes {dimension_semantics = [], scalar_prefetch = 0 : i64, scratch_operands = 0 : i64, tpu.core_type = #tpu.core_type<tc>} {
    %c0 = arith.constant 0 : index
    %c0_0 = arith.constant 0 : index
    %0 = vector.load %arg2[%c0, %c0_0] : memref<560x64xf32, #tpu.memory_space<vmem>>, vector<48x4xf32>
    %1 = vector.extract_strided_slice %0 {offsets = [0, 0], sizes = [48, 1], strides = [1, 1]} : vector<48x4xf32> to vector<48x1xf32>
    %2 = vector.extract_strided_slice %0 {offsets = [0, 1], sizes = [48, 1], strides = [1, 1]} : vector<48x4xf32> to vector<48x1xf32>
    %3 = vector.extract_strided_slice %0 {offsets = [0, 2], sizes = [48, 1], strides = [1, 1]} : vector<48x4xf32> to vector<48x1xf32>
    %4 = vector.extract_strided_slice %0 {offsets = [0, 3], sizes = [48, 1], strides = [1, 1]} : vector<48x4xf32> to vector<48x1xf32>
    %cst = arith.constant 0.000000e+00 : f32
    %5 = vector.broadcast %cst : f32 to vector<48x1xf32>
    %cst_1 = arith.constant 0.000000e+00 : f32
    %6 = vector.broadcast %cst_1 : f32 to vector<48x1xf32>
    %7 = arith.cmpf oeq, %4, %6 : vector<48x1xf32>
    %c0_2 = arith.constant 0 : index
    %8 = memref.load %arg1[%c0_2] : memref<2xf32, #tpu.memory_space<smem>>
    %9 = vector.broadcast %8 : f32 to vector<48x1xf32>
    %10 = arith.select %7, %9, %5 : vector<48x1xi1>, vector<48x1xf32>
    %cst_3 = arith.constant 1.000000e+00 : f32
    %11 = vector.broadcast %cst_3 : f32 to vector<48x1xf32>
    %12 = arith.cmpf oeq, %4, %11 : vector<48x1xf32>
    %c1 = arith.constant 1 : index
    %13 = memref.load %arg1[%c1] : memref<2xf32, #tpu.memory_space<smem>>
    %14 = vector.broadcast %13 : f32 to vector<48x1xf32>
    %15 = arith.select %12, %14, %10 : vector<48x1xi1>, vector<48x1xf32>
    %16 = arith.cmpf olt, %3, %15 : vector<48x1xf32>
    %c0_4 = arith.constant 0 : index
    %c0_5 = arith.constant 0 : index
    %17 = vector.load %arg0[%c0_4, %c0_5] : memref<48x8xf32, #tpu.memory_space<vmem>>, vector<48x8xf32>
    %cst_6 = arith.constant 0.000000e+00 : f32
    %18 = vector.shape_cast %16 : vector<48x1xi1> to vector<48x1xi1>
    %19 = vector.broadcast %18 : vector<48x1xi1> to vector<48x8xi1>
    %20 = vector.broadcast %cst_6 : f32 to vector<48x8xf32>
    %21 = arith.select %19, %17, %20 : vector<48x8xi1>, vector<48x8xf32>
    %22 = tpu.concatenate %21, %1, %2 in 1 : vector<48x8xf32>, vector<48x1xf32>, vector<48x1xf32> -> vector<48x10xf32>
    %c48 = arith.constant 48 : index
    %c0_7 = arith.constant 0 : index
    %23 = vector.load %arg2[%c48, %c0_7] : memref<560x64xf32, #tpu.memory_space<vmem>>, vector<48x2xf32>
    %cst_8 = arith.constant 0.000000e+00 : f32
    %24 = vector.broadcast %cst_8 : f32 to vector<1x10xf32>
    %25 = vector.extract_strided_slice %22 {offsets = [0, 0], sizes = [47, 10], strides = [1, 1]} : vector<48x10xf32> to vector<47x10xf32>
    %26 = tpu.concatenate %24, %25 in 0 : vector<1x10xf32>, vector<47x10xf32> -> vector<48x10xf32>
    %27 = vector.extract_strided_slice %23 {offsets = [0, 0], sizes = [48, 1], strides = [1, 1]} : vector<48x2xf32> to vector<48x1xf32>
    %28 = vector.broadcast %27 : vector<48x1xf32> to vector<48x10xf32>
    %29 = arith.mulf %26, %28 : vector<48x10xf32>
    %30 = vector.extract_strided_slice %22 {offsets = [1, 0], sizes = [47, 10], strides = [1, 1]} : vector<48x10xf32> to vector<47x10xf32>
    %31 = tpu.concatenate %30, %24 in 0 : vector<47x10xf32>, vector<1x10xf32> -> vector<48x10xf32>
    %32 = vector.extract_strided_slice %23 {offsets = [0, 1], sizes = [48, 1], strides = [1, 1]} : vector<48x2xf32> to vector<48x1xf32>
    %33 = vector.broadcast %32 : vector<48x1xf32> to vector<48x10xf32>
    %34 = arith.mulf %31, %33 : vector<48x10xf32>
    %35 = tpu.concatenate %29, %22, %34 in 1 : vector<48x10xf32>, vector<48x10xf32>, vector<48x10xf32> -> vector<48x30xf32>
    %c96 = arith.constant 96 : index
    %c0_9 = arith.constant 0 : index
    %36 = vector.load %arg2[%c96, %c0_9] : memref<560x64xf32, #tpu.memory_space<vmem>>, vector<30x8xf32>
    %cst_10 = arith.constant dense<0.000000e+00> : vector<48x8xf32>
    %37 = tpu.matmul %35, %36, %cst_10 {dimension_numbers = #tpu.dot_dimension_numbers<[1], [0], [0], [1], [0, 0, 1, 1], [], []>} : vector<48x30xf32>, vector<30x8xf32>, vector<48x8xf32> -> vector<48x8xf32>
    %c128 = arith.constant 128 : index
    %c0_11 = arith.constant 0 : index
    %38 = vector.load %arg2[%c128, %c0_11] : memref<560x64xf32, #tpu.memory_space<vmem>>, vector<3x8xf32>
    %39 = vector.extract_strided_slice %38 {offsets = [0, 0], sizes = [1, 8], strides = [1, 1]} : vector<3x8xf32> to vector<1x8xf32>
    %40 = vector.broadcast %39 : vector<1x8xf32> to vector<48x8xf32>
    %41 = arith.addf %37, %40 : vector<48x8xf32>
    %cst_12 = arith.constant 0.000000e+00 : f32
    %42 = vector.broadcast %cst_12 : f32 to vector<48x8xf32>
    %43 = arith.cmpf oge, %41, %42 : vector<48x8xf32>
    %cst_13 = arith.constant 3.000000e-01 : f32
    %44 = vector.broadcast %cst_13 : f32 to vector<48x8xf32>
    %45 = arith.mulf %44, %41 : vector<48x8xf32>
    %46 = arith.select %43, %41, %45 : vector<48x8xi1>, vector<48x8xf32>
    %c136 = arith.constant 136 : index
    %c0_14 = arith.constant 0 : index
    %47 = vector.load %arg2[%c136, %c0_14] : memref<560x64xf32, #tpu.memory_space<vmem>>, vector<2x48xf32>
    %cst_15 = arith.constant dense<0.000000e+00> : vector<2x8xf32>
    %48 = tpu.matmul %47, %46, %cst_15 {dimension_numbers = #tpu.dot_dimension_numbers<[1], [0], [0], [1], [0, 0, 1, 1], [], []>} : vector<2x48xf32>, vector<48x8xf32>, vector<2x8xf32> -> vector<2x8xf32>
    %49 = arith.mulf %46, %46 : vector<48x8xf32>
    %cst_16 = arith.constant dense<0.000000e+00> : vector<2x8xf32>
    %50 = tpu.matmul %47, %49, %cst_16 {dimension_numbers = #tpu.dot_dimension_numbers<[1], [0], [0], [1], [0, 0, 1, 1], [], []>} : vector<2x48xf32>, vector<48x8xf32>, vector<2x8xf32> -> vector<2x8xf32>
    %51 = arith.mulf %48, %48 : vector<2x8xf32>
    %52 = arith.subf %50, %51 : vector<2x8xf32>
    %cst_17 = arith.constant 0.000000e+00 : f32
    %53 = vector.broadcast %cst_17 : f32 to vector<2x8xf32>
    %54 = arith.maximumf %52, %53 : vector<2x8xf32>
    %cst_18 = arith.constant 9.99999974E-6 : f32
    %55 = vector.broadcast %cst_18 : f32 to vector<2x8xf32>
    %56 = arith.addf %54, %55 : vector<2x8xf32>
    %57 = math.rsqrt %56 : vector<2x8xf32>
    %58 = vector.extract_strided_slice %38 {offsets = [1, 0], sizes = [1, 8], strides = [1, 1]} : vector<3x8xf32> to vector<1x8xf32>
    %59 = vector.broadcast %58 : vector<1x8xf32> to vector<2x8xf32>
    %60 = arith.mulf %59, %57 : vector<2x8xf32>
    %61 = vector.extract_strided_slice %38 {offsets = [2, 0], sizes = [1, 8], strides = [1, 1]} : vector<3x8xf32> to vector<1x8xf32>
    %62 = arith.mulf %48, %60 : vector<2x8xf32>
    %63 = vector.broadcast %61 : vector<1x8xf32> to vector<2x8xf32>
    %64 = arith.subf %63, %62 : vector<2x8xf32>
    %c144 = arith.constant 144 : index
    %c0_19 = arith.constant 0 : index
    %65 = vector.load %arg2[%c144, %c0_19] : memref<560x64xf32, #tpu.memory_space<vmem>>, vector<48x2xf32>
    %66 = tpu.concatenate %60, %64 in 1 : vector<2x8xf32>, vector<2x8xf32> -> vector<2x16xf32>
    %cst_20 = arith.constant dense<0.000000e+00> : vector<48x16xf32>
    %67 = tpu.matmul %65, %66, %cst_20 {dimension_numbers = #tpu.dot_dimension_numbers<[1], [0], [0], [1], [0, 0, 1, 1], [], []>} : vector<48x2xf32>, vector<2x16xf32>, vector<48x16xf32> -> vector<48x16xf32>
    %68 = vector.extract_strided_slice %67 {offsets = [0, 0], sizes = [48, 8], strides = [1, 1]} : vector<48x16xf32> to vector<48x8xf32>
    %69 = arith.mulf %46, %68 : vector<48x8xf32>
    %70 = vector.extract_strided_slice %67 {offsets = [0, 8], sizes = [48, 8], strides = [1, 1]} : vector<48x16xf32> to vector<48x8xf32>
    %71 = arith.addf %69, %70 : vector<48x8xf32>
    %c192 = arith.constant 192 : index
    %c0_21 = arith.constant 0 : index
    %72 = vector.load %arg2[%c192, %c0_21] : memref<560x64xf32, #tpu.memory_space<vmem>>, vector<48x2xf32>
    %cst_22 = arith.constant 0.000000e+00 : f32
    %73 = vector.broadcast %cst_22 : f32 to vector<1x8xf32>
    %74 = vector.extract_strided_slice %71 {offsets = [0, 0], sizes = [47, 8], strides = [1, 1]} : vector<48x8xf32> to vector<47x8xf32>
    %75 = tpu.concatenate %73, %74 in 0 : vector<1x8xf32>, vector<47x8xf32> -> vector<48x8xf32>
    %76 = vector.extract_strided_slice %72 {offsets = [0, 0], sizes = [48, 1], strides = [1, 1]} : vector<48x2xf32> to vector<48x1xf32>
    %77 = vector.broadcast %76 : vector<48x1xf32> to vector<48x8xf32>
    %78 = arith.mulf %75, %77 : vector<48x8xf32>
    %79 = vector.extract_strided_slice %71 {offsets = [1, 0], sizes = [47, 8], strides = [1, 1]} : vector<48x8xf32> to vector<47x8xf32>
    %80 = tpu.concatenate %79, %73 in 0 : vector<47x8xf32>, vector<1x8xf32> -> vector<48x8xf32>
    %81 = vector.extract_strided_slice %72 {offsets = [0, 1], sizes = [48, 1], strides = [1, 1]} : vector<48x2xf32> to vector<48x1xf32>
    %82 = vector.broadcast %81 : vector<48x1xf32> to vector<48x8xf32>
    %83 = arith.mulf %80, %82 : vector<48x8xf32>
    %84 = tpu.concatenate %78, %71, %83 in 1 : vector<48x8xf32>, vector<48x8xf32>, vector<48x8xf32> -> vector<48x24xf32>
    %c240 = arith.constant 240 : index
    %c0_23 = arith.constant 0 : index
    %85 = vector.load %arg2[%c240, %c0_23] : memref<560x64xf32, #tpu.memory_space<vmem>>, vector<24x8xf32>
    %cst_24 = arith.constant dense<0.000000e+00> : vector<48x8xf32>
    %86 = tpu.matmul %84, %85, %cst_24 {dimension_numbers = #tpu.dot_dimension_numbers<[1], [0], [0], [1], [0, 0, 1, 1], [], []>} : vector<48x24xf32>, vector<24x8xf32>, vector<48x8xf32> -> vector<48x8xf32>
    %c272 = arith.constant 272 : index
    %c0_25 = arith.constant 0 : index
    %87 = vector.load %arg2[%c272, %c0_25] : memref<560x64xf32, #tpu.memory_space<vmem>>, vector<24x48xf32>
    %cst_26 = arith.constant dense<0.000000e+00> : vector<24x8xf32>
    %88 = tpu.matmul %87, %86, %cst_26 {dimension_numbers = #tpu.dot_dimension_numbers<[1], [0], [0], [1], [0, 0, 1, 1], [], []>} : vector<24x48xf32>, vector<48x8xf32>, vector<24x8xf32> -> vector<24x8xf32>
    %c264 = arith.constant 264 : index
    %c0_27 = arith.constant 0 : index
    %89 = vector.load %arg2[%c264, %c0_27] : memref<560x64xf32, #tpu.memory_space<vmem>>, vector<3x8xf32>
    %90 = vector.extract_strided_slice %89 {offsets = [0, 0], sizes = [1, 8], strides = [1, 1]} : vector<3x8xf32> to vector<1x8xf32>
    %91 = vector.broadcast %90 : vector<1x8xf32> to vector<24x8xf32>
    %92 = arith.addf %88, %91 : vector<24x8xf32>
    %cst_28 = arith.constant 0.000000e+00 : f32
    %93 = vector.broadcast %cst_28 : f32 to vector<24x8xf32>
    %94 = arith.cmpf oge, %92, %93 : vector<24x8xf32>
    %cst_29 = arith.constant 3.000000e-01 : f32
    %95 = vector.broadcast %cst_29 : f32 to vector<24x8xf32>
    %96 = arith.mulf %95, %92 : vector<24x8xf32>
    %97 = arith.select %94, %92, %96 : vector<24x8xi1>, vector<24x8xf32>
    %c296 = arith.constant 296 : index
    %c0_30 = arith.constant 0 : index
    %98 = vector.load %arg2[%c296, %c0_30] : memref<560x64xf32, #tpu.memory_space<vmem>>, vector<2x24xf32>
    %cst_31 = arith.constant dense<0.000000e+00> : vector<2x8xf32>
    %99 = tpu.matmul %98, %97, %cst_31 {dimension_numbers = #tpu.dot_dimension_numbers<[1], [0], [0], [1], [0, 0, 1, 1], [], []>} : vector<2x24xf32>, vector<24x8xf32>, vector<2x8xf32> -> vector<2x8xf32>
    %100 = arith.mulf %97, %97 : vector<24x8xf32>
    %cst_32 = arith.constant dense<0.000000e+00> : vector<2x8xf32>
    %101 = tpu.matmul %98, %100, %cst_32 {dimension_numbers = #tpu.dot_dimension_numbers<[1], [0], [0], [1], [0, 0, 1, 1], [], []>} : vector<2x24xf32>, vector<24x8xf32>, vector<2x8xf32> -> vector<2x8xf32>
    %102 = arith.mulf %99, %99 : vector<2x8xf32>
    %103 = arith.subf %101, %102 : vector<2x8xf32>
    %cst_33 = arith.constant 0.000000e+00 : f32
    %104 = vector.broadcast %cst_33 : f32 to vector<2x8xf32>
    %105 = arith.maximumf %103, %104 : vector<2x8xf32>
    %cst_34 = arith.constant 9.99999974E-6 : f32
    %106 = vector.broadcast %cst_34 : f32 to vector<2x8xf32>
    %107 = arith.addf %105, %106 : vector<2x8xf32>
    %108 = math.rsqrt %107 : vector<2x8xf32>
    %109 = vector.extract_strided_slice %89 {offsets = [1, 0], sizes = [1, 8], strides = [1, 1]} : vector<3x8xf32> to vector<1x8xf32>
    %110 = vector.broadcast %109 : vector<1x8xf32> to vector<2x8xf32>
    %111 = arith.mulf %110, %108 : vector<2x8xf32>
    %112 = vector.extract_strided_slice %89 {offsets = [2, 0], sizes = [1, 8], strides = [1, 1]} : vector<3x8xf32> to vector<1x8xf32>
    %113 = arith.mulf %99, %111 : vector<2x8xf32>
    %114 = vector.broadcast %112 : vector<1x8xf32> to vector<2x8xf32>
    %115 = arith.subf %114, %113 : vector<2x8xf32>
    %c304 = arith.constant 304 : index
    %c0_35 = arith.constant 0 : index
    %116 = vector.load %arg2[%c304, %c0_35] : memref<560x64xf32, #tpu.memory_space<vmem>>, vector<24x2xf32>
    %117 = tpu.concatenate %111, %115 in 1 : vector<2x8xf32>, vector<2x8xf32> -> vector<2x16xf32>
    %cst_36 = arith.constant dense<0.000000e+00> : vector<24x16xf32>
    %118 = tpu.matmul %116, %117, %cst_36 {dimension_numbers = #tpu.dot_dimension_numbers<[1], [0], [0], [1], [0, 0, 1, 1], [], []>} : vector<24x2xf32>, vector<2x16xf32>, vector<24x16xf32> -> vector<24x16xf32>
    %119 = vector.extract_strided_slice %118 {offsets = [0, 0], sizes = [24, 8], strides = [1, 1]} : vector<24x16xf32> to vector<24x8xf32>
    %120 = arith.mulf %97, %119 : vector<24x8xf32>
    %121 = vector.extract_strided_slice %118 {offsets = [0, 8], sizes = [24, 8], strides = [1, 1]} : vector<24x16xf32> to vector<24x8xf32>
    %122 = arith.addf %120, %121 : vector<24x8xf32>
    %c328 = arith.constant 328 : index
    %c0_37 = arith.constant 0 : index
    %123 = vector.load %arg2[%c328, %c0_37] : memref<560x64xf32, #tpu.memory_space<vmem>>, vector<24x2xf32>
    %cst_38 = arith.constant 0.000000e+00 : f32
    %124 = vector.broadcast %cst_38 : f32 to vector<1x8xf32>
    %125 = vector.extract_strided_slice %122 {offsets = [0, 0], sizes = [23, 8], strides = [1, 1]} : vector<24x8xf32> to vector<23x8xf32>
    %126 = tpu.concatenate %124, %125 in 0 : vector<1x8xf32>, vector<23x8xf32> -> vector<24x8xf32>
    %127 = vector.extract_strided_slice %123 {offsets = [0, 0], sizes = [24, 1], strides = [1, 1]} : vector<24x2xf32> to vector<24x1xf32>
    %128 = vector.broadcast %127 : vector<24x1xf32> to vector<24x8xf32>
    %129 = arith.mulf %126, %128 : vector<24x8xf32>
    %130 = vector.extract_strided_slice %122 {offsets = [1, 0], sizes = [23, 8], strides = [1, 1]} : vector<24x8xf32> to vector<23x8xf32>
    %131 = tpu.concatenate %130, %124 in 0 : vector<23x8xf32>, vector<1x8xf32> -> vector<24x8xf32>
    %132 = vector.extract_strided_slice %123 {offsets = [0, 1], sizes = [24, 1], strides = [1, 1]} : vector<24x2xf32> to vector<24x1xf32>
    %133 = vector.broadcast %132 : vector<24x1xf32> to vector<24x8xf32>
    %134 = arith.mulf %131, %133 : vector<24x8xf32>
    %135 = tpu.concatenate %129, %122, %134 in 1 : vector<24x8xf32>, vector<24x8xf32>, vector<24x8xf32> -> vector<24x24xf32>
    %c352 = arith.constant 352 : index
    %c0_39 = arith.constant 0 : index
    %136 = vector.load %arg2[%c352, %c0_39] : memref<560x64xf32, #tpu.memory_space<vmem>>, vector<24x16xf32>
    %cst_40 = arith.constant dense<0.000000e+00> : vector<24x16xf32>
    %137 = tpu.matmul %135, %136, %cst_40 {dimension_numbers = #tpu.dot_dimension_numbers<[1], [0], [0], [1], [0, 0, 1, 1], [], []>} : vector<24x24xf32>, vector<24x16xf32>, vector<24x16xf32> -> vector<24x16xf32>
    %c384 = arith.constant 384 : index
    %c0_41 = arith.constant 0 : index
    %138 = vector.load %arg2[%c384, %c0_41] : memref<560x64xf32, #tpu.memory_space<vmem>>, vector<12x24xf32>
    %cst_42 = arith.constant dense<0.000000e+00> : vector<12x16xf32>
    %139 = tpu.matmul %138, %137, %cst_42 {dimension_numbers = #tpu.dot_dimension_numbers<[1], [0], [0], [1], [0, 0, 1, 1], [], []>} : vector<12x24xf32>, vector<24x16xf32>, vector<12x16xf32> -> vector<12x16xf32>
    %c376 = arith.constant 376 : index
    %c0_43 = arith.constant 0 : index
    %140 = vector.load %arg2[%c376, %c0_43] : memref<560x64xf32, #tpu.memory_space<vmem>>, vector<3x16xf32>
    %141 = vector.extract_strided_slice %140 {offsets = [0, 0], sizes = [1, 16], strides = [1, 1]} : vector<3x16xf32> to vector<1x16xf32>
    %142 = vector.broadcast %141 : vector<1x16xf32> to vector<12x16xf32>
    %143 = arith.addf %139, %142 : vector<12x16xf32>
    %cst_44 = arith.constant 0.000000e+00 : f32
    %144 = vector.broadcast %cst_44 : f32 to vector<12x16xf32>
    %145 = arith.cmpf oge, %143, %144 : vector<12x16xf32>
    %cst_45 = arith.constant 3.000000e-01 : f32
    %146 = vector.broadcast %cst_45 : f32 to vector<12x16xf32>
    %147 = arith.mulf %146, %143 : vector<12x16xf32>
    %148 = arith.select %145, %143, %147 : vector<12x16xi1>, vector<12x16xf32>
    %c400 = arith.constant 400 : index
    %c0_46 = arith.constant 0 : index
    %149 = vector.load %arg2[%c400, %c0_46] : memref<560x64xf32, #tpu.memory_space<vmem>>, vector<2x12xf32>
    %cst_47 = arith.constant dense<0.000000e+00> : vector<2x16xf32>
    %150 = tpu.matmul %149, %148, %cst_47 {dimension_numbers = #tpu.dot_dimension_numbers<[1], [0], [0], [1], [0, 0, 1, 1], [], []>} : vector<2x12xf32>, vector<12x16xf32>, vector<2x16xf32> -> vector<2x16xf32>
    %151 = arith.mulf %148, %148 : vector<12x16xf32>
    %cst_48 = arith.constant dense<0.000000e+00> : vector<2x16xf32>
    %152 = tpu.matmul %149, %151, %cst_48 {dimension_numbers = #tpu.dot_dimension_numbers<[1], [0], [0], [1], [0, 0, 1, 1], [], []>} : vector<2x12xf32>, vector<12x16xf32>, vector<2x16xf32> -> vector<2x16xf32>
    %153 = arith.mulf %150, %150 : vector<2x16xf32>
    %154 = arith.subf %152, %153 : vector<2x16xf32>
    %cst_49 = arith.constant 0.000000e+00 : f32
    %155 = vector.broadcast %cst_49 : f32 to vector<2x16xf32>
    %156 = arith.maximumf %154, %155 : vector<2x16xf32>
    %cst_50 = arith.constant 9.99999974E-6 : f32
    %157 = vector.broadcast %cst_50 : f32 to vector<2x16xf32>
    %158 = arith.addf %156, %157 : vector<2x16xf32>
    %159 = math.rsqrt %158 : vector<2x16xf32>
    %160 = vector.extract_strided_slice %140 {offsets = [1, 0], sizes = [1, 16], strides = [1, 1]} : vector<3x16xf32> to vector<1x16xf32>
    %161 = vector.broadcast %160 : vector<1x16xf32> to vector<2x16xf32>
    %162 = arith.mulf %161, %159 : vector<2x16xf32>
    %163 = vector.extract_strided_slice %140 {offsets = [2, 0], sizes = [1, 16], strides = [1, 1]} : vector<3x16xf32> to vector<1x16xf32>
    %164 = arith.mulf %150, %162 : vector<2x16xf32>
    %165 = vector.broadcast %163 : vector<1x16xf32> to vector<2x16xf32>
    %166 = arith.subf %165, %164 : vector<2x16xf32>
    %c408 = arith.constant 408 : index
    %c0_51 = arith.constant 0 : index
    %167 = vector.load %arg2[%c408, %c0_51] : memref<560x64xf32, #tpu.memory_space<vmem>>, vector<12x2xf32>
    %168 = tpu.concatenate %162, %166 in 1 : vector<2x16xf32>, vector<2x16xf32> -> vector<2x32xf32>
    %cst_52 = arith.constant dense<0.000000e+00> : vector<12x32xf32>
    %169 = tpu.matmul %167, %168, %cst_52 {dimension_numbers = #tpu.dot_dimension_numbers<[1], [0], [0], [1], [0, 0, 1, 1], [], []>} : vector<12x2xf32>, vector<2x32xf32>, vector<12x32xf32> -> vector<12x32xf32>
    %170 = vector.extract_strided_slice %169 {offsets = [0, 0], sizes = [12, 16], strides = [1, 1]} : vector<12x32xf32> to vector<12x16xf32>
    %171 = arith.mulf %148, %170 : vector<12x16xf32>
    %172 = vector.extract_strided_slice %169 {offsets = [0, 16], sizes = [12, 16], strides = [1, 1]} : vector<12x32xf32> to vector<12x16xf32>
    %173 = arith.addf %171, %172 : vector<12x16xf32>
    %c440 = arith.constant 440 : index
    %c0_53 = arith.constant 0 : index
    %174 = vector.load %arg2[%c440, %c0_53] : memref<560x64xf32, #tpu.memory_space<vmem>>, vector<16x48xf32>
    %c456 = arith.constant 456 : index
    %c0_54 = arith.constant 0 : index
    %175 = vector.load %arg2[%c456, %c0_54] : memref<560x64xf32, #tpu.memory_space<vmem>>, vector<2x48xf32>
    %c424 = arith.constant 424 : index
    %c0_55 = arith.constant 0 : index
    %176 = vector.load %arg2[%c424, %c0_55] : memref<560x64xf32, #tpu.memory_space<vmem>>, vector<16x48xf32>
    %cst_56 = arith.constant dense<0.000000e+00> : vector<12x48xf32>
    %177 = tpu.matmul %173, %176, %cst_56 {dimension_numbers = #tpu.dot_dimension_numbers<[1], [0], [0], [1], [0, 0, 1, 1], [], []>} : vector<12x16xf32>, vector<16x48xf32>, vector<12x48xf32> -> vector<12x48xf32>
    %178 = vector.extract_strided_slice %175 {offsets = [0, 0], sizes = [1, 48], strides = [1, 1]} : vector<2x48xf32> to vector<1x48xf32>
    %179 = vector.broadcast %178 : vector<1x48xf32> to vector<12x48xf32>
    %180 = arith.addf %177, %179 : vector<12x48xf32>
    %181 = vector.extract_strided_slice %175 {offsets = [1, 0], sizes = [1, 48], strides = [1, 1]} : vector<2x48xf32> to vector<1x48xf32>
    %182 = tpu.iota {dimensions = array<i32: 0>} : vector<2x1xi32>
    %cst_57 = arith.constant 0.000000e+00 : f32
    %183 = vector.broadcast %cst_57 : f32 to vector<2x1xf32>
    %c0_i32 = arith.constant 0 : i32
    %184 = vector.broadcast %c0_i32 : i32 to vector<2x1xi32>
    %185 = arith.cmpi eq, %182, %184 : vector<2x1xi32>
    %c0_58 = arith.constant 0 : index
    %186 = memref.load %arg1[%c0_58] : memref<2xf32, #tpu.memory_space<smem>>
    %187 = vector.broadcast %186 : f32 to vector<2x1xf32>
    %188 = arith.select %185, %187, %183 : vector<2x1xi1>, vector<2x1xf32>
    %c1_i32 = arith.constant 1 : i32
    %189 = vector.broadcast %c1_i32 : i32 to vector<2x1xi32>
    %190 = arith.cmpi eq, %182, %189 : vector<2x1xi32>
    %c1_59 = arith.constant 1 : index
    %191 = memref.load %arg1[%c1_59] : memref<2xf32, #tpu.memory_space<smem>>
    %192 = vector.broadcast %191 : f32 to vector<2x1xf32>
    %193 = arith.select %190, %192, %188 : vector<2x1xi1>, vector<2x1xf32>
    %cst_60 = arith.constant 0.000000e+00 : f32
    %194 = vector.broadcast %cst_60 : f32 to vector<2x16xf32>
    %195 = vector.extract_strided_slice %180 {offsets = [0, 0], sizes = [2, 48], strides = [1, 1]} : vector<12x48xf32> to vector<2x48xf32>
    %cst_61 = arith.constant dense<0.000000e+00> : vector<2x48xf32>
    %196 = tpu.matmul %194, %174, %cst_61 {dimension_numbers = #tpu.dot_dimension_numbers<[1], [0], [0], [1], [0, 0, 1, 1], [], []>} : vector<2x16xf32>, vector<16x48xf32>, vector<2x48xf32> -> vector<2x48xf32>
    %197 = vector.broadcast %181 : vector<1x48xf32> to vector<2x48xf32>
    %198 = arith.addf %196, %197 : vector<2x48xf32>
    %199 = vector.extract_strided_slice %195 {offsets = [0, 0], sizes = [2, 32], strides = [1, 1]} : vector<2x48xf32> to vector<2x32xf32>
    %200 = vector.extract_strided_slice %198 {offsets = [0, 0], sizes = [2, 32], strides = [1, 1]} : vector<2x48xf32> to vector<2x32xf32>
    %201 = arith.addf %199, %200 : vector<2x32xf32>
    %202 = arith.negf %201 : vector<2x32xf32>
    %203 = math.exp %202 : vector<2x32xf32>
    %cst_62 = arith.constant 1.000000e+00 : f32
    %204 = vector.broadcast %cst_62 : f32 to vector<2x32xf32>
    %205 = arith.addf %204, %203 : vector<2x32xf32>
    %206 = arith.divf %204, %205 : vector<2x32xf32>
    %207 = vector.extract_strided_slice %206 {offsets = [0, 0], sizes = [2, 16], strides = [1, 1]} : vector<2x32xf32> to vector<2x16xf32>
    %208 = vector.extract_strided_slice %206 {offsets = [0, 16], sizes = [2, 16], strides = [1, 1]} : vector<2x32xf32> to vector<2x16xf32>
    %209 = vector.extract_strided_slice %195 {offsets = [0, 32], sizes = [2, 16], strides = [1, 1]} : vector<2x48xf32> to vector<2x16xf32>
    %210 = vector.extract_strided_slice %198 {offsets = [0, 32], sizes = [2, 16], strides = [1, 1]} : vector<2x48xf32> to vector<2x16xf32>
    %211 = arith.mulf %207, %210 : vector<2x16xf32>
    %212 = arith.addf %209, %211 : vector<2x16xf32>
    %213 = math.tanh %212 : vector<2x16xf32>
    %cst_63 = arith.constant 1.000000e+00 : f32
    %214 = vector.broadcast %cst_63 : f32 to vector<2x16xf32>
    %215 = arith.subf %214, %208 : vector<2x16xf32>
    %216 = arith.mulf %215, %213 : vector<2x16xf32>
    %217 = arith.mulf %208, %194 : vector<2x16xf32>
    %218 = arith.addf %216, %217 : vector<2x16xf32>
    %cst_64 = arith.constant 0.000000e+00 : f32
    %219 = vector.broadcast %cst_64 : f32 to vector<2x1xf32>
    %220 = arith.cmpf ogt, %193, %219 : vector<2x1xf32>
    %221 = vector.shape_cast %220 : vector<2x1xi1> to vector<2x1xi1>
    %222 = vector.broadcast %221 : vector<2x1xi1> to vector<2x16xi1>
    %223 = arith.select %222, %218, %194 : vector<2x16xi1>, vector<2x16xf32>
    %224 = vector.extract_strided_slice %180 {offsets = [2, 0], sizes = [2, 48], strides = [1, 1]} : vector<12x48xf32> to vector<2x48xf32>
    %cst_65 = arith.constant dense<0.000000e+00> : vector<2x48xf32>
    %225 = tpu.matmul %223, %174, %cst_65 {dimension_numbers = #tpu.dot_dimension_numbers<[1], [0], [0], [1], [0, 0, 1, 1], [], []>} : vector<2x16xf32>, vector<16x48xf32>, vector<2x48xf32> -> vector<2x48xf32>
    %226 = vector.broadcast %181 : vector<1x48xf32> to vector<2x48xf32>
    %227 = arith.addf %225, %226 : vector<2x48xf32>
    %228 = vector.extract_strided_slice %224 {offsets = [0, 0], sizes = [2, 32], strides = [1, 1]} : vector<2x48xf32> to vector<2x32xf32>
    %229 = vector.extract_strided_slice %227 {offsets = [0, 0], sizes = [2, 32], strides = [1, 1]} : vector<2x48xf32> to vector<2x32xf32>
    %230 = arith.addf %228, %229 : vector<2x32xf32>
    %231 = arith.negf %230 : vector<2x32xf32>
    %232 = math.exp %231 : vector<2x32xf32>
    %cst_66 = arith.constant 1.000000e+00 : f32
    %233 = vector.broadcast %cst_66 : f32 to vector<2x32xf32>
    %234 = arith.addf %233, %232 : vector<2x32xf32>
    %235 = arith.divf %233, %234 : vector<2x32xf32>
    %236 = vector.extract_strided_slice %235 {offsets = [0, 0], sizes = [2, 16], strides = [1, 1]} : vector<2x32xf32> to vector<2x16xf32>
    %237 = vector.extract_strided_slice %235 {offsets = [0, 16], sizes = [2, 16], strides = [1, 1]} : vector<2x32xf32> to vector<2x16xf32>
    %238 = vector.extract_strided_slice %224 {offsets = [0, 32], sizes = [2, 16], strides = [1, 1]} : vector<2x48xf32> to vector<2x16xf32>
    %239 = vector.extract_strided_slice %227 {offsets = [0, 32], sizes = [2, 16], strides = [1, 1]} : vector<2x48xf32> to vector<2x16xf32>
    %240 = arith.mulf %236, %239 : vector<2x16xf32>
    %241 = arith.addf %238, %240 : vector<2x16xf32>
    %242 = math.tanh %241 : vector<2x16xf32>
    %cst_67 = arith.constant 1.000000e+00 : f32
    %243 = vector.broadcast %cst_67 : f32 to vector<2x16xf32>
    %244 = arith.subf %243, %237 : vector<2x16xf32>
    %245 = arith.mulf %244, %242 : vector<2x16xf32>
    %246 = arith.mulf %237, %223 : vector<2x16xf32>
    %247 = arith.addf %245, %246 : vector<2x16xf32>
    %cst_68 = arith.constant 4.000000e+00 : f32
    %248 = vector.broadcast %cst_68 : f32 to vector<2x1xf32>
    %249 = arith.cmpf ogt, %193, %248 : vector<2x1xf32>
    %250 = vector.shape_cast %249 : vector<2x1xi1> to vector<2x1xi1>
    %251 = vector.broadcast %250 : vector<2x1xi1> to vector<2x16xi1>
    %252 = arith.select %251, %247, %223 : vector<2x16xi1>, vector<2x16xf32>
    %253 = vector.extract_strided_slice %180 {offsets = [4, 0], sizes = [2, 48], strides = [1, 1]} : vector<12x48xf32> to vector<2x48xf32>
    %cst_69 = arith.constant dense<0.000000e+00> : vector<2x48xf32>
    %254 = tpu.matmul %252, %174, %cst_69 {dimension_numbers = #tpu.dot_dimension_numbers<[1], [0], [0], [1], [0, 0, 1, 1], [], []>} : vector<2x16xf32>, vector<16x48xf32>, vector<2x48xf32> -> vector<2x48xf32>
    %255 = vector.broadcast %181 : vector<1x48xf32> to vector<2x48xf32>
    %256 = arith.addf %254, %255 : vector<2x48xf32>
    %257 = vector.extract_strided_slice %253 {offsets = [0, 0], sizes = [2, 32], strides = [1, 1]} : vector<2x48xf32> to vector<2x32xf32>
    %258 = vector.extract_strided_slice %256 {offsets = [0, 0], sizes = [2, 32], strides = [1, 1]} : vector<2x48xf32> to vector<2x32xf32>
    %259 = arith.addf %257, %258 : vector<2x32xf32>
    %260 = arith.negf %259 : vector<2x32xf32>
    %261 = math.exp %260 : vector<2x32xf32>
    %cst_70 = arith.constant 1.000000e+00 : f32
    %262 = vector.broadcast %cst_70 : f32 to vector<2x32xf32>
    %263 = arith.addf %262, %261 : vector<2x32xf32>
    %264 = arith.divf %262, %263 : vector<2x32xf32>
    %265 = vector.extract_strided_slice %264 {offsets = [0, 0], sizes = [2, 16], strides = [1, 1]} : vector<2x32xf32> to vector<2x16xf32>
    %266 = vector.extract_strided_slice %264 {offsets = [0, 16], sizes = [2, 16], strides = [1, 1]} : vector<2x32xf32> to vector<2x16xf32>
    %267 = vector.extract_strided_slice %253 {offsets = [0, 32], sizes = [2, 16], strides = [1, 1]} : vector<2x48xf32> to vector<2x16xf32>
    %268 = vector.extract_strided_slice %256 {offsets = [0, 32], sizes = [2, 16], strides = [1, 1]} : vector<2x48xf32> to vector<2x16xf32>
    %269 = arith.mulf %265, %268 : vector<2x16xf32>
    %270 = arith.addf %267, %269 : vector<2x16xf32>
    %271 = math.tanh %270 : vector<2x16xf32>
    %cst_71 = arith.constant 1.000000e+00 : f32
    %272 = vector.broadcast %cst_71 : f32 to vector<2x16xf32>
    %273 = arith.subf %272, %266 : vector<2x16xf32>
    %274 = arith.mulf %273, %271 : vector<2x16xf32>
    %275 = arith.mulf %266, %252 : vector<2x16xf32>
    %276 = arith.addf %274, %275 : vector<2x16xf32>
    %cst_72 = arith.constant 8.000000e+00 : f32
    %277 = vector.broadcast %cst_72 : f32 to vector<2x1xf32>
    %278 = arith.cmpf ogt, %193, %277 : vector<2x1xf32>
    %279 = vector.shape_cast %278 : vector<2x1xi1> to vector<2x1xi1>
    %280 = vector.broadcast %279 : vector<2x1xi1> to vector<2x16xi1>
    %281 = arith.select %280, %276, %252 : vector<2x16xi1>, vector<2x16xf32>
    %282 = vector.extract_strided_slice %180 {offsets = [6, 0], sizes = [2, 48], strides = [1, 1]} : vector<12x48xf32> to vector<2x48xf32>
    %cst_73 = arith.constant dense<0.000000e+00> : vector<2x48xf32>
    %283 = tpu.matmul %281, %174, %cst_73 {dimension_numbers = #tpu.dot_dimension_numbers<[1], [0], [0], [1], [0, 0, 1, 1], [], []>} : vector<2x16xf32>, vector<16x48xf32>, vector<2x48xf32> -> vector<2x48xf32>
    %284 = vector.broadcast %181 : vector<1x48xf32> to vector<2x48xf32>
    %285 = arith.addf %283, %284 : vector<2x48xf32>
    %286 = vector.extract_strided_slice %282 {offsets = [0, 0], sizes = [2, 32], strides = [1, 1]} : vector<2x48xf32> to vector<2x32xf32>
    %287 = vector.extract_strided_slice %285 {offsets = [0, 0], sizes = [2, 32], strides = [1, 1]} : vector<2x48xf32> to vector<2x32xf32>
    %288 = arith.addf %286, %287 : vector<2x32xf32>
    %289 = arith.negf %288 : vector<2x32xf32>
    %290 = math.exp %289 : vector<2x32xf32>
    %cst_74 = arith.constant 1.000000e+00 : f32
    %291 = vector.broadcast %cst_74 : f32 to vector<2x32xf32>
    %292 = arith.addf %291, %290 : vector<2x32xf32>
    %293 = arith.divf %291, %292 : vector<2x32xf32>
    %294 = vector.extract_strided_slice %293 {offsets = [0, 0], sizes = [2, 16], strides = [1, 1]} : vector<2x32xf32> to vector<2x16xf32>
    %295 = vector.extract_strided_slice %293 {offsets = [0, 16], sizes = [2, 16], strides = [1, 1]} : vector<2x32xf32> to vector<2x16xf32>
    %296 = vector.extract_strided_slice %282 {offsets = [0, 32], sizes = [2, 16], strides = [1, 1]} : vector<2x48xf32> to vector<2x16xf32>
    %297 = vector.extract_strided_slice %285 {offsets = [0, 32], sizes = [2, 16], strides = [1, 1]} : vector<2x48xf32> to vector<2x16xf32>
    %298 = arith.mulf %294, %297 : vector<2x16xf32>
    %299 = arith.addf %296, %298 : vector<2x16xf32>
    %300 = math.tanh %299 : vector<2x16xf32>
    %cst_75 = arith.constant 1.000000e+00 : f32
    %301 = vector.broadcast %cst_75 : f32 to vector<2x16xf32>
    %302 = arith.subf %301, %295 : vector<2x16xf32>
    %303 = arith.mulf %302, %300 : vector<2x16xf32>
    %304 = arith.mulf %295, %281 : vector<2x16xf32>
    %305 = arith.addf %303, %304 : vector<2x16xf32>
    %cst_76 = arith.constant 1.200000e+01 : f32
    %306 = vector.broadcast %cst_76 : f32 to vector<2x1xf32>
    %307 = arith.cmpf ogt, %193, %306 : vector<2x1xf32>
    %308 = vector.shape_cast %307 : vector<2x1xi1> to vector<2x1xi1>
    %309 = vector.broadcast %308 : vector<2x1xi1> to vector<2x16xi1>
    %310 = arith.select %309, %305, %281 : vector<2x16xi1>, vector<2x16xf32>
    %311 = vector.extract_strided_slice %180 {offsets = [8, 0], sizes = [2, 48], strides = [1, 1]} : vector<12x48xf32> to vector<2x48xf32>
    %cst_77 = arith.constant dense<0.000000e+00> : vector<2x48xf32>
    %312 = tpu.matmul %310, %174, %cst_77 {dimension_numbers = #tpu.dot_dimension_numbers<[1], [0], [0], [1], [0, 0, 1, 1], [], []>} : vector<2x16xf32>, vector<16x48xf32>, vector<2x48xf32> -> vector<2x48xf32>
    %313 = vector.broadcast %181 : vector<1x48xf32> to vector<2x48xf32>
    %314 = arith.addf %312, %313 : vector<2x48xf32>
    %315 = vector.extract_strided_slice %311 {offsets = [0, 0], sizes = [2, 32], strides = [1, 1]} : vector<2x48xf32> to vector<2x32xf32>
    %316 = vector.extract_strided_slice %314 {offsets = [0, 0], sizes = [2, 32], strides = [1, 1]} : vector<2x48xf32> to vector<2x32xf32>
    %317 = arith.addf %315, %316 : vector<2x32xf32>
    %318 = arith.negf %317 : vector<2x32xf32>
    %319 = math.exp %318 : vector<2x32xf32>
    %cst_78 = arith.constant 1.000000e+00 : f32
    %320 = vector.broadcast %cst_78 : f32 to vector<2x32xf32>
    %321 = arith.addf %320, %319 : vector<2x32xf32>
    %322 = arith.divf %320, %321 : vector<2x32xf32>
    %323 = vector.extract_strided_slice %322 {offsets = [0, 0], sizes = [2, 16], strides = [1, 1]} : vector<2x32xf32> to vector<2x16xf32>
    %324 = vector.extract_strided_slice %322 {offsets = [0, 16], sizes = [2, 16], strides = [1, 1]} : vector<2x32xf32> to vector<2x16xf32>
    %325 = vector.extract_strided_slice %311 {offsets = [0, 32], sizes = [2, 16], strides = [1, 1]} : vector<2x48xf32> to vector<2x16xf32>
    %326 = vector.extract_strided_slice %314 {offsets = [0, 32], sizes = [2, 16], strides = [1, 1]} : vector<2x48xf32> to vector<2x16xf32>
    %327 = arith.mulf %323, %326 : vector<2x16xf32>
    %328 = arith.addf %325, %327 : vector<2x16xf32>
    %329 = math.tanh %328 : vector<2x16xf32>
    %cst_79 = arith.constant 1.000000e+00 : f32
    %330 = vector.broadcast %cst_79 : f32 to vector<2x16xf32>
    %331 = arith.subf %330, %324 : vector<2x16xf32>
    %332 = arith.mulf %331, %329 : vector<2x16xf32>
    %333 = arith.mulf %324, %310 : vector<2x16xf32>
    %334 = arith.addf %332, %333 : vector<2x16xf32>
    %cst_80 = arith.constant 1.600000e+01 : f32
    %335 = vector.broadcast %cst_80 : f32 to vector<2x1xf32>
    %336 = arith.cmpf ogt, %193, %335 : vector<2x1xf32>
    %337 = vector.shape_cast %336 : vector<2x1xi1> to vector<2x1xi1>
    %338 = vector.broadcast %337 : vector<2x1xi1> to vector<2x16xi1>
    %339 = arith.select %338, %334, %310 : vector<2x16xi1>, vector<2x16xf32>
    %340 = vector.extract_strided_slice %180 {offsets = [10, 0], sizes = [2, 48], strides = [1, 1]} : vector<12x48xf32> to vector<2x48xf32>
    %cst_81 = arith.constant dense<0.000000e+00> : vector<2x48xf32>
    %341 = tpu.matmul %339, %174, %cst_81 {dimension_numbers = #tpu.dot_dimension_numbers<[1], [0], [0], [1], [0, 0, 1, 1], [], []>} : vector<2x16xf32>, vector<16x48xf32>, vector<2x48xf32> -> vector<2x48xf32>
    %342 = vector.broadcast %181 : vector<1x48xf32> to vector<2x48xf32>
    %343 = arith.addf %341, %342 : vector<2x48xf32>
    %344 = vector.extract_strided_slice %340 {offsets = [0, 0], sizes = [2, 32], strides = [1, 1]} : vector<2x48xf32> to vector<2x32xf32>
    %345 = vector.extract_strided_slice %343 {offsets = [0, 0], sizes = [2, 32], strides = [1, 1]} : vector<2x48xf32> to vector<2x32xf32>
    %346 = arith.addf %344, %345 : vector<2x32xf32>
    %347 = arith.negf %346 : vector<2x32xf32>
    %348 = math.exp %347 : vector<2x32xf32>
    %cst_82 = arith.constant 1.000000e+00 : f32
    %349 = vector.broadcast %cst_82 : f32 to vector<2x32xf32>
    %350 = arith.addf %349, %348 : vector<2x32xf32>
    %351 = arith.divf %349, %350 : vector<2x32xf32>
    %352 = vector.extract_strided_slice %351 {offsets = [0, 0], sizes = [2, 16], strides = [1, 1]} : vector<2x32xf32> to vector<2x16xf32>
    %353 = vector.extract_strided_slice %351 {offsets = [0, 16], sizes = [2, 16], strides = [1, 1]} : vector<2x32xf32> to vector<2x16xf32>
    %354 = vector.extract_strided_slice %340 {offsets = [0, 32], sizes = [2, 16], strides = [1, 1]} : vector<2x48xf32> to vector<2x16xf32>
    %355 = vector.extract_strided_slice %343 {offsets = [0, 32], sizes = [2, 16], strides = [1, 1]} : vector<2x48xf32> to vector<2x16xf32>
    %356 = arith.mulf %352, %355 : vector<2x16xf32>
    %357 = arith.addf %354, %356 : vector<2x16xf32>
    %358 = math.tanh %357 : vector<2x16xf32>
    %cst_83 = arith.constant 1.000000e+00 : f32
    %359 = vector.broadcast %cst_83 : f32 to vector<2x16xf32>
    %360 = arith.subf %359, %353 : vector<2x16xf32>
    %361 = arith.mulf %360, %358 : vector<2x16xf32>
    %362 = arith.mulf %353, %339 : vector<2x16xf32>
    %363 = arith.addf %361, %362 : vector<2x16xf32>
    %cst_84 = arith.constant 2.000000e+01 : f32
    %364 = vector.broadcast %cst_84 : f32 to vector<2x1xf32>
    %365 = arith.cmpf ogt, %193, %364 : vector<2x1xf32>
    %366 = vector.shape_cast %365 : vector<2x1xi1> to vector<2x1xi1>
    %367 = vector.broadcast %366 : vector<2x1xi1> to vector<2x16xi1>
    %368 = arith.select %367, %363, %339 : vector<2x16xi1>, vector<2x16xf32>
    %c480 = arith.constant 480 : index
    %c0_85 = arith.constant 0 : index
    %369 = vector.load %arg2[%c480, %c0_85] : memref<560x64xf32, #tpu.memory_space<vmem>>, vector<2x32xf32>
    %c464 = arith.constant 464 : index
    %c0_86 = arith.constant 0 : index
    %370 = vector.load %arg2[%c464, %c0_86] : memref<560x64xf32, #tpu.memory_space<vmem>>, vector<16x32xf32>
    %cst_87 = arith.constant dense<0.000000e+00> : vector<2x32xf32>
    %371 = tpu.matmul %368, %370, %cst_87 {dimension_numbers = #tpu.dot_dimension_numbers<[1], [0], [0], [1], [0, 0, 1, 1], [], []>} : vector<2x16xf32>, vector<16x32xf32>, vector<2x32xf32> -> vector<2x32xf32>
    %372 = vector.extract_strided_slice %369 {offsets = [0, 0], sizes = [1, 32], strides = [1, 1]} : vector<2x32xf32> to vector<1x32xf32>
    %373 = vector.broadcast %372 : vector<1x32xf32> to vector<2x32xf32>
    %374 = arith.addf %371, %373 : vector<2x32xf32>
    %c488 = arith.constant 488 : index
    %c0_88 = arith.constant 0 : index
    %375 = vector.load %arg2[%c488, %c0_88] : memref<560x64xf32, #tpu.memory_space<vmem>>, vector<32x8xf32>
    %cst_89 = arith.constant dense<0.000000e+00> : vector<2x8xf32>
    %376 = tpu.matmul %374, %375, %cst_89 {dimension_numbers = #tpu.dot_dimension_numbers<[1], [0], [0], [1], [0, 0, 1, 1], [], []>} : vector<2x32xf32>, vector<32x8xf32>, vector<2x8xf32> -> vector<2x8xf32>
    %cst_90 = arith.constant 0.176776692 : f32
    %377 = vector.broadcast %cst_90 : f32 to vector<2x8xf32>
    %378 = arith.mulf %376, %377 : vector<2x8xf32>
    %cst_91 = arith.constant dense<0xFF800000> : vector<8xf32>
    %379 = vector.multi_reduction <maximumf>, %378, %cst_91 [0] : vector<2x8xf32> to vector<8xf32>
    %380 = vector.shape_cast %379 : vector<8xf32> to vector<1x8xf32>
    %381 = vector.broadcast %380 : vector<1x8xf32> to vector<2x8xf32>
    %382 = arith.subf %378, %381 : vector<2x8xf32>
    %383 = math.exp %382 : vector<2x8xf32>
    %cst_92 = arith.constant dense<0.000000e+00> : vector<8xf32>
    %384 = vector.multi_reduction <add>, %383, %cst_92 [0] : vector<2x8xf32> to vector<8xf32>
    %385 = vector.shape_cast %384 : vector<8xf32> to vector<1x8xf32>
    %386 = vector.broadcast %385 : vector<1x8xf32> to vector<2x8xf32>
    %387 = arith.divf %383, %386 : vector<2x8xf32>
    %c520 = arith.constant 520 : index
    %c0_93 = arith.constant 0 : index
    %388 = vector.load %arg2[%c520, %c0_93] : memref<560x64xf32, #tpu.memory_space<vmem>>, vector<8x32xf32>
    %cst_94 = arith.constant dense<0.000000e+00> : vector<2x32xf32>
    %389 = tpu.matmul %387, %388, %cst_94 {dimension_numbers = #tpu.dot_dimension_numbers<[1], [0], [0], [1], [0, 0, 1, 1], [], []>} : vector<2x8xf32>, vector<8x32xf32>, vector<2x32xf32> -> vector<2x32xf32>
    %c528 = arith.constant 528 : index
    %c0_95 = arith.constant 0 : index
    %390 = vector.load %arg2[%c528, %c0_95] : memref<560x64xf32, #tpu.memory_space<vmem>>, vector<32x32xf32>
    %cst_96 = arith.constant dense<0.000000e+00> : vector<2x32xf32>
    %391 = tpu.matmul %389, %390, %cst_96 {dimension_numbers = #tpu.dot_dimension_numbers<[1], [0], [0], [1], [0, 0, 1, 1], [], []>} : vector<2x32xf32>, vector<32x32xf32>, vector<2x32xf32> -> vector<2x32xf32>
    %392 = vector.extract_strided_slice %369 {offsets = [1, 0], sizes = [1, 32], strides = [1, 1]} : vector<2x32xf32> to vector<1x32xf32>
    %393 = vector.broadcast %392 : vector<1x32xf32> to vector<2x32xf32>
    %394 = arith.addf %391, %393 : vector<2x32xf32>
    %c0_97 = arith.constant 0 : index
    %c0_98 = arith.constant 0 : index
    %395 = vector.load %arg3[%c0_97, %c0_98] : memref<2x32xf32, #tpu.memory_space<vmem>>, vector<2x32xf32>
    tpu.vector_store %arg3[%c0_97, %c0_98], %394 {strides = array<i32>} : memref<2x32xf32, #tpu.memory_space<vmem>>, vector<2x32xf32>,
    return
  }
}

</mosaic_0001>

<llo_original>
// kernel: utterance_level_prosody_encoder.1
$region0: #{utterance_level_prosody_encoder.1}
  #allocation0 [shape = 'u32[]', space=smem, size = 0x4, offset = 0x4, fixed_abs, tag = 'smem constant byte address 0x4 - core index']
  #allocation1 [shape = 'u32[72,128]{1,0:T(1,128)}', space=vmem, size = 0x9000, scoped, tag = 'internal scratch']
  %s0 = inlined_call_operand.vmem [shape: f32[48,8], index: 0, kind: input, shape index: {}]
  %s1 = inlined_call_operand.vmem [shape: f32[2], index: 1, kind: input, shape index: {}]
  %s2 = inlined_call_operand.vmem [shape: f32[560,64], index: 2, kind: input, shape index: {}]
  %s3 = inlined_call_operand.hbm [shape: f32[2,32], index: 3, kind: output, shape index: {}]
  %s4 = sld [smem:[#allocation0]]
  $region26: #{utterance_level_prosody_encoder.1} parent=0
    _
  %s6 = ssub.s32 1, %s4
  %s7 = scalar_select 0, %s6, %s4
  $region1: #{utterance_level_prosody_encoder.1} parent=0
    #allocation2 [shape = 'u8[512]{0}', space=smem, size = 0x200, scoped, tag = 'input window, operand 1, single buffered']
    #allocation3 [shape = 's32[1]{0}', space=sflag, size = 0x4, scoped, tag = 'scoped memory for utterance_level_prosody_encoder.1']
    #allocation4 [shape = 's32[1]{0}', space=sflag, size = 0x4, scoped, tag = 'scoped memory for utterance_level_prosody_encoder.1']
    #allocation5 [shape = 'u8[1024]{0}', space=vmem, size = 0x400, scoped, tag = 'output window, operand 0, single buffered']
    %8 = vsyncpa [#allocation4], 0
    %9 = vsyncpa [#allocation3], 0
    // Predicated region
    $region2: #{utterance_level_prosody_encoder.1} parent=1 // pred_check
      _
    $region3: #{utterance_level_prosody_encoder.1} parent=1 // pred_check_branch
      %11 = sbr.rel (0) target = $region5
    $region4: #{utterance_level_prosody_encoder.1} parent=1 // pred_region
      _
    $region5: #{utterance_level_prosody_encoder.1} parent=1 // pred_fallthru
      _
    // Predicated region
    $region6: #{utterance_level_prosody_encoder.1} parent=1 // pred_check
      _
    $region7: #{utterance_level_prosody_encoder.1} parent=1 // pred_check_branch
      %13 = sbr.rel (0) target = $region9
    $region8: #{utterance_level_prosody_encoder.1} parent=1 // pred_region
      %15 = vsyncadd [#allocation4], 0
      %s17 = sshll.u32 %s1, 4
      %s18 = int_to_ptr.vmem [resolvable:$true] %s17
      %20 = dma.vmem_to_smem %s18, 16, [#allocation2], [#allocation4]
    $region9: #{utterance_level_prosody_encoder.1} parent=1 // pred_fallthru
      _
    // Predicated region
    $region10: #{utterance_level_prosody_encoder.1} parent=1 // pred_check
      _
    $region11: #{utterance_level_prosody_encoder.1} parent=1 // pred_check_branch
      %22 = sbr.rel (0) target = $region13
    $region12: #{utterance_level_prosody_encoder.1} parent=1 // pred_region
      _
    $region13: #{utterance_level_prosody_encoder.1} parent=1 // pred_fallthru
      _
    // Predicated region
    $region14: #{utterance_level_prosody_encoder.1} parent=1 // pred_check
      _
    $region15: #{utterance_level_prosody_encoder.1} parent=1 // pred_check_branch
      %24 = sbr.rel (0) target = $region17
    $region16: #{utterance_level_prosody_encoder.1} parent=1 // pred_region
      %26 = dma.done [#allocation4], 16
    $region17: #{utterance_level_prosody_encoder.1} parent=1 // pred_fallthru
      _
    %27 = sfence
    %v28 = vld [vmem:[%s2] sm:$0xff]
    %v29 = vld [vmem:[%s2 + $0x8] sm:$0xff]
    %v30 = vld [vmem:[%s2 + $0x10] sm:$0xff]
    %v31 = vld [vmem:[%s2 + $0x18] sm:$0xff]
    %v32 = vld [vmem:[%s2 + $0x20] sm:$0xff]
    %v33 = vld [vmem:[%s2 + $0x28] sm:$0xff]
    %vm34 = vcmp.eq.f32.partialorder %v28, 0.0
    %vm35 = vcmp.eq.f32.partialorder %v29, 0.0
    %vm36 = vcmp.eq.f32.partialorder %v30, 0.0
    %vm37 = vcmp.eq.f32.partialorder %v31, 0.0
    %vm38 = vcmp.eq.f32.partialorder %v32, 0.0
    %vm39 = vcmp.eq.f32.partialorder %v33, 0.0
    %s40 = sld [smem:[#allocation2]]
    %v41 = vstv %s40
    %v42 = vsel %vm34, %v41, 0.0
    %v43 = vsel %vm35, %v41, 0.0
    %v44 = vsel %vm36, %v41, 0.0
    %v45 = vsel %vm37, %v41, 0.0
    %v46 = vsel %vm38, %v41, 0.0
    %v47 = vsel %vm39, %v41, 0.0
    %vm48 = vcmp.eq.f32.partialorder %v28, 1.0
    %vm49 = vcmp.eq.f32.partialorder %v29, 1.0
    %vm50 = vcmp.eq.f32.partialorder %v30, 1.0
    %vm51 = vcmp.eq.f32.partialorder %v31, 1.0
    %vm52 = vcmp.eq.f32.partialorder %v32, 1.0
    %vm53 = vcmp.eq.f32.partialorder %v33, 1.0
    %s54 = sld [smem:[#allocation2 + $0x1]]
    %v55 = vstv %s54
    %v56 = vsel %vm48, %v55, %v42
    %v57 = vsel %vm49, %v55, %v43
    %v58 = vsel %vm50, %v55, %v44
    %v59 = vsel %vm51, %v55, %v45
    %v60 = vsel %vm52, %v55, %v46
    %v61 = vsel %vm53, %v55, %v47
    %68 = vrot.lane.b32.xlu0 %v56, 127
    %v69 = vpop.permute.xlu0 %68
    %70 = vrot.lane.b32.xlu0 %v57, 127
    %v71 = vpop.permute.xlu0 %70
    %72 = vrot.lane.b32.xlu0 %v58, 127
    %v73 = vpop.permute.xlu0 %72
    %74 = vrot.lane.b32.xlu0 %v59, 127
    %v75 = vpop.permute.xlu0 %74
    %76 = vrot.lane.b32.xlu0 %v60, 127
    %v77 = vpop.permute.xlu0 %76
    %78 = vrot.lane.b32.xlu0 %v61, 127
    %v79 = vpop.permute.xlu0 %78
    %vm86 = vcmp.lt.f32.partialorder %v28, %v69
    %vm87 = vcmp.lt.f32.partialorder %v29, %v71
    %vm88 = vcmp.lt.f32.partialorder %v30, %v73
    %vm89 = vcmp.lt.f32.partialorder %v31, %v75
    %vm90 = vcmp.lt.f32.partialorder %v32, %v77
    %vm91 = vcmp.lt.f32.partialorder %v33, %v79
    %v92 = vld [vmem:[%s0] sm:$0xff]
    %v93 = vld [vmem:[%s0 + $0x8] sm:$0xff]
    %v94 = vld [vmem:[%s0 + $0x10] sm:$0xff]
    %v95 = vld [vmem:[%s0 + $0x18] sm:$0xff]
    %v96 = vld [vmem:[%s0 + $0x20] sm:$0xff]
    %v97 = vld [vmem:[%s0 + $0x28] sm:$0xff]
    %v98 = vsel %vm86, 1, 0
    %v99 = vsel %vm87, 1, 0
    %v100 = vsel %vm88, 1, 0
    %v101 = vsel %vm89, 1, 0
    %v102 = vsel %vm90, 1, 0
    %v103 = vsel %vm91, 1, 0
    %104 = vset.pattern.permute.xlu0 2
    %105 = vperm.xlu0 %104, %v98
    %v106 = vpop.permute.xlu0 %105
    %107 = vset.pattern.permute.xlu0 2
    %108 = vperm.xlu0 %107, %v99
    %v109 = vpop.permute.xlu0 %108
    %110 = vset.pattern.permute.xlu0 2
    %111 = vperm.xlu0 %110, %v100
    %v112 = vpop.permute.xlu0 %111
    %113 = vset.pattern.permute.xlu0 2
    %114 = vperm.xlu0 %113, %v101
    %v115 = vpop.permute.xlu0 %114
    %116 = vset.pattern.permute.xlu0 2
    %117 = vperm.xlu0 %116, %v102
    %v118 = vpop.permute.xlu0 %117
    %119 = vset.pattern.permute.xlu0 2
    %120 = vperm.xlu0 %119, %v103
    %v121 = vpop.permute.xlu0 %120
    %vm122 = vcmp.eq.s32.totalorder %v106, 1
    %vm123 = vcmp.eq.s32.totalorder %v109, 1
    %vm124 = vcmp.eq.s32.totalorder %v112, 1
    %vm125 = vcmp.eq.s32.totalorder %v115, 1
    %vm126 = vcmp.eq.s32.totalorder %v118, 1
    %vm127 = vcmp.eq.s32.totalorder %v121, 1
    %v128 = vsel %vm122, %v92, 0.0
    %v129 = vsel %vm123, %v93, 0.0
    %v130 = vsel %vm124, %v94, 0.0
    %v131 = vsel %vm125, %v95, 0.0
    %v132 = vsel %vm126, %v96, 0.0
    %v133 = vsel %vm127, %v97, 0.0
    %140 = vrot.lane.b32.xlu0 %v28, 8
    %v141 = vpop.permute.xlu0 %140
    %142 = vrot.lane.b32.xlu0 %v29, 8
    %v143 = vpop.permute.xlu0 %142
    %144 = vrot.lane.b32.xlu0 %v30, 8
    %v145 = vpop.permute.xlu0 %144
    %146 = vrot.lane.b32.xlu0 %v31, 8
    %v147 = vpop.permute.xlu0 %146
    %148 = vrot.lane.b32.xlu0 %v32, 8
    %v149 = vpop.permute.xlu0 %148
    %150 = vrot.lane.b32.xlu0 %v33, 8
    %v151 = vpop.permute.xlu0 %150
    %vm158 = vcmask 64512
    %v159 = vsel %vm158, %v128, %v141
    %v160 = vsel %vm158, %v129, %v143
    %v161 = vsel %vm158, %v130, %v145
    %v162 = vsel %vm158, %v131, %v147
    %v163 = vsel %vm158, %v132, %v149
    %v164 = vsel %vm158, %v133, %v151
    %vm165 = vcmask 72704
    %v166 = vsel %vm165, %v159, %v141
    %v167 = vsel %vm165, %v160, %v143
    %v168 = vsel %vm165, %v161, %v145
    %v169 = vsel %vm165, %v162, %v147
    %v170 = vsel %vm165, %v163, %v149
    %v171 = vsel %vm165, %v164, %v151
    %v172 = vld [vmem:[%s2 + $0x30] sm:$0xff]
    %v173 = vld [vmem:[%s2 + $0x38] sm:$0xff]
    %v174 = vld [vmem:[%s2 + $0x40] sm:$0xff]
    %v175 = vld [vmem:[%s2 + $0x48] sm:$0xff]
    %v176 = vld [vmem:[%s2 + $0x50] sm:$0xff]
    %v177 = vld [vmem:[%s2 + $0x58] sm:$0xff]
    %vm184 = vcmask 1040384
    %v185 = vrot.slane %v166, 7
    %v186 = vrot.slane %v167, 7
    %v187 = vsel %vm184, %v185, %v186
    %v188 = vrot.slane %v168, 7
    %v189 = vsel %vm184, %v186, %v188
    %v190 = vrot.slane %v169, 7
    %v191 = vsel %vm184, %v188, %v190
    %v192 = vrot.slane %v170, 7
    %v193 = vsel %vm184, %v190, %v192
    %v194 = vrot.slane %v171, 7
    %v195 = vsel %vm184, %v192, %v194
    %v202 = vsel %vm184, 0.0, %v185
    %204 = vset.pattern.permute.xlu0 0
    %205 = vperm.xlu0 %204, %v172
    %v206 = vpop.permute.xlu0 %205
    %209 = vset.pattern.permute.xlu0 0
    %210 = vperm.xlu0 %209, %v173
    %v211 = vpop.permute.xlu0 %210
    %214 = vset.pattern.permute.xlu0 0
    %215 = vperm.xlu0 %214, %v174
    %v216 = vpop.permute.xlu0 %215
    %219 = vset.pattern.permute.xlu0 0
    %220 = vperm.xlu0 %219, %v175
    %v221 = vpop.permute.xlu0 %220
    %224 = vset.pattern.permute.xlu0 0
    %225 = vperm.xlu0 %224, %v176
    %v226 = vpop.permute.xlu0 %225
    %229 = vset.pattern.permute.xlu0 0
    %230 = vperm.xlu0 %229, %v177
    %v231 = vpop.permute.xlu0 %230
    %v233 = vmul.f32 %v202, %v206
    %v234 = vmul.f32 %v187, %v211
    %v235 = vmul.f32 %v189, %v216
    %v236 = vmul.f32 %v191, %v221
    %v237 = vmul.f32 %v193, %v226
    %v238 = vmul.f32 %v195, %v231
    %vm239 = vcmask 1046528
    %v240 = vrot.slane %v166, 1
    %v241 = vrot.slane %v167, 1
    %v242 = vsel %vm239, %v240, %v241
    %v243 = vrot.slane %v168, 1
    %v244 = vsel %vm239, %v241, %v243
    %v245 = vrot.slane %v169, 1
    %v246 = vsel %vm239, %v243, %v245
    %v247 = vrot.slane %v170, 1
    %v248 = vsel %vm239, %v245, %v247
    %v249 = vrot.slane %v171, 1
    %v250 = vsel %vm239, %v247, %v249
    %v257 = vsel %vm239, %v249, 0.0
    %258 = vset.pattern.permute.xlu0 1
    %259 = vperm.xlu0 %258, %v172
    %v260 = vpop.permute.xlu0 %259
    %262 = vset.pattern.permute.xlu0 1
    %263 = vperm.xlu0 %262, %v173
    %v264 = vpop.permute.xlu0 %263
    %266 = vset.pattern.permute.xlu0 1
    %267 = vperm.xlu0 %266, %v174
    %v268 = vpop.permute.xlu0 %267
    %270 = vset.pattern.permute.xlu0 1
    %271 = vperm.xlu0 %270, %v175
    %v272 = vpop.permute.xlu0 %271
    %274 = vset.pattern.permute.xlu0 1
    %275 = vperm.xlu0 %274, %v176
    %v276 = vpop.permute.xlu0 %275
    %278 = vset.pattern.permute.xlu0 1
    %279 = vperm.xlu0 %278, %v177
    %v280 = vpop.permute.xlu0 %279
    %v282 = vmul.f32 %v242, %v260
    %v283 = vmul.f32 %v244, %v264
    %v284 = vmul.f32 %v246, %v268
    %v285 = vmul.f32 %v248, %v272
    %v286 = vmul.f32 %v250, %v276
    %v287 = vmul.f32 %v257, %v280
    %288 = vrot.lane.b32.xlu0 %v166, 10
    %v289 = vpop.permute.xlu0 %288
    %290 = vrot.lane.b32.xlu0 %v167, 10
    %v291 = vpop.permute.xlu0 %290
    %292 = vrot.lane.b32.xlu0 %v168, 10
    %v293 = vpop.permute.xlu0 %292
    %294 = vrot.lane.b32.xlu0 %v169, 10
    %v295 = vpop.permute.xlu0 %294
    %296 = vrot.lane.b32.xlu0 %v170, 10
    %v297 = vpop.permute.xlu0 %296
    %298 = vrot.lane.b32.xlu0 %v171, 10
    %v299 = vpop.permute.xlu0 %298
    %312 = vrot.lane.b32.xlu0 %v282, 20
    %v313 = vpop.permute.xlu0 %312
    %314 = vrot.lane.b32.xlu0 %v283, 20
    %v315 = vpop.permute.xlu0 %314
    %316 = vrot.lane.b32.xlu0 %v284, 20
    %v317 = vpop.permute.xlu0 %316
    %318 = vrot.lane.b32.xlu0 %v285, 20
    %v319 = vpop.permute.xlu0 %318
    %320 = vrot.lane.b32.xlu0 %v286, 20
    %v321 = vpop.permute.xlu0 %320
    %322 = vrot.lane.b32.xlu0 %v287, 20
    %v323 = vpop.permute.xlu0 %322
    %vm330 = vcmask 80896
    %v331 = vsel %vm330, %v233, %v289
    %v332 = vsel %vm330, %v234, %v291
    %v333 = vsel %vm330, %v235, %v293
    %v334 = vsel %vm330, %v236, %v295
    %v335 = vsel %vm330, %v237, %v297
    %v336 = vsel %vm330, %v238, %v299
    %vm337 = vcmask 162816
    %v338 = vsel %vm337, %v331, %v313
    %v339 = vsel %vm337, %v332, %v315
    %v340 = vsel %vm337, %v333, %v317
    %v341 = vsel %vm337, %v334, %v319
    %v342 = vsel %vm337, %v335, %v321
    %v343 = vsel %vm337, %v336, %v323
    %v344 = vld [vmem:[%s2 + $0x60] sm:$0xff]
    %v345 = vld [vmem:[%s2 + $0x68] sm:$0xff]
    %v346 = vld [vmem:[%s2 + $0x70] sm:$0xff]
    %v347 = vld [vmem:[%s2 + $0x78] sm:$0x3f]
    %v348 = vld [vmem:[%s2 + $0x80] sm:$0x7]
    %v349 = vperm.slane %v348, 0
    %vm350 = vcmask 244736
    %v352 = vsel %vm350, %v338, 0
    %v355 = vsel %vm350, %v339, 0
    %v358 = vsel %vm350, %v340, 0
    %v361 = vsel %vm350, %v341, 0
    %v364 = vsel %vm350, %v342, 0
    %v367 = vsel %vm350, %v343, 0
    %vm369 = vcmask 1045504
    %v371 = vsel %vm369, %v347, 0
    %373 = vmatpush.msra.mxu0 0.0
    %374 = vmatpush.msra.mxu0 0.0
    %375 = vmatpush.msra.mxu0 0.0
    %376 = vmatpush.msra.mxu0 0.0
    %377 = vmatpush.msra.mxu0 0.0
    %378 = vmatpush.msra.mxu0 0.0
    %379 = vmatpush.msra.mxu0 0.0
    %380 = vmatpush.msra.mxu0 0.0
    %381 = vmatpush.msra.mxu0 0.0
    %382 = vmatpush.msra.mxu0 0.0
    %383 = vmatpush.msra.mxu0 0.0
    %384 = vmatpush.msra.mxu0 0.0
    %385 = vmatpush.msra.mxu0 %v371
    %386 = vmatpush.msra.mxu0 %v346
    %387 = vmatpush.msra.mxu0 %v345
    %388 = vmatpush.msra.mxu0 %v344
    %389 = vmatmul.f32.gmra.mxu0 %v352
    %v390 = vpop.f32.mrf.mxu0
    %v391 = vadd.f32 %v349, %v390
    %392 = vmatmul.f32.gmra.mxu0 %v355
    %v393 = vpop.f32.mrf.mxu0
    %v394 = vadd.f32 %v349, %v393
    %395 = vmatmul.f32.gmra.mxu0 %v358
    %v396 = vpop.f32.mrf.mxu0
    %v397 = vadd.f32 %v349, %v396
    %398 = vmatmul.f32.gmra.mxu0 %v361
    %v399 = vpop.f32.mrf.mxu0
    %v400 = vadd.f32 %v349, %v399
    %401 = vmatmul.f32.gmra.mxu0 %v364
    %v402 = vpop.f32.mrf.mxu0
    %v403 = vadd.f32 %v349, %v402
    %404 = vmatmul.f32.gmra.mxu0 %v367
    %v405 = vpop.f32.mrf.mxu0
    %v406 = vadd.f32 %v349, %v405
    %407 = vdwg.mxu0
    %vm408 = vcmp.ge.f32.partialorder %v391, 0.0
    %vm409 = vcmp.ge.f32.partialorder %v394, 0.0
    %vm410 = vcmp.ge.f32.partialorder %v397, 0.0
    %vm411 = vcmp.ge.f32.partialorder %v400, 0.0
    %vm412 = vcmp.ge.f32.partialorder %v403, 0.0
    %vm413 = vcmp.ge.f32.partialorder %v406, 0.0
    %v414 = vmul.f32 %v391, 0.3
    %v415 = vmul.f32 %v394, 0.3
    %v416 = vmul.f32 %v397, 0.3
    %v417 = vmul.f32 %v400, 0.3
    %v418 = vmul.f32 %v403, 0.3
    %v419 = vmul.f32 %v406, 0.3
    %v420 = vsel %vm408, %v391, %v414
    %v421 = vsel %vm409, %v394, %v415
    %v422 = vsel %vm410, %v397, %v416
    %v423 = vsel %vm411, %v400, %v417
    %v424 = vsel %vm412, %v403, %v418
    %v425 = vsel %vm413, %v406, %v419
    %v426 = vld [vmem:[%s2 + $0x88] sm:$0x3]
    %vm427 = vcmask 392192
    %v429 = vsel %vm427, %v426, 0
    %431 = vmatpush.msra.mxu0 0.0
    %432 = vmatpush.msra.mxu0 0.0
    %433 = vmatpush.msra.mxu0 0.0
    %434 = vmatpush.msra.mxu0 0.0
    %435 = vmatpush.msra.mxu0 0.0
    %436 = vmatpush.msra.mxu0 0.0
    %437 = vmatpush.msra.mxu0 0.0
    %438 = vmatpush.msra.mxu0 0.0
    %439 = vmatpush.msra.mxu0 0.0
    %440 = vmatpush.msra.mxu0 0.0
    %441 = vmatpush.msra.mxu0 %v425
    %442 = vmatpush.msra.mxu0 %v424
    %443 = vmatpush.msra.mxu0 %v423
    %444 = vmatpush.msra.mxu0 %v422
    %445 = vmatpush.msra.mxu0 %v421
    %446 = vmatpush.msra.mxu0 %v420
    %447 = vmatmul.f32.gmra.mxu0 %v429
    %v448 = vpop.f32.mrf.mxu0
    %v449 = vadd.f32 0.0, %v448
    %450 = vdwg.mxu0
    %v451 = vmul.f32 %v420, %v420
    %v452 = vmul.f32 %v421, %v421
    %v453 = vmul.f32 %v422, %v422
    %v454 = vmul.f32 %v423, %v423
    %v455 = vmul.f32 %v424, %v424
    %v456 = vmul.f32 %v425, %v425
    %457 = vmatpush.msra.mxu0 0.0
    %458 = vmatpush.msra.mxu0 0.0
    %459 = vmatpush.msra.mxu0 0.0
    %460 = vmatpush.msra.mxu0 0.0
    %461 = vmatpush.msra.mxu0 0.0
    %462 = vmatpush.msra.mxu0 0.0
    %463 = vmatpush.msra.mxu0 0.0
    %464 = vmatpush.msra.mxu0 0.0
    %465 = vmatpush.msra.mxu0 0.0
    %466 = vmatpush.msra.mxu0 0.0
    %467 = vmatpush.msra.mxu0 %v456
    %468 = vmatpush.msra.mxu0 %v455
    %469 = vmatpush.msra.mxu0 %v454
    %470 = vmatpush.msra.mxu0 %v453
    %471 = vmatpush.msra.mxu0 %v452
    %472 = vmatpush.msra.mxu0 %v451
    %473 = vmatmul.f32.gmra.mxu0 %v429
    %v474 = vpop.f32.mrf.mxu0
    %v475 = vadd.f32 0.0, %v474
    %476 = vdwg.mxu0
    %v477 = vmul.f32 %v449, %v449
    %v478 = vsub.f32 %v475, %v477
    %v479 = vmax.f32 %v478, 0.0
    %v480 = vadd.f32 %v479, 1e-05
    %v481 = vrsqrt.pop %v480
    %v482 = vmul.f32 %v481, %v480
    %v483 = vmul.f32 %v482, %v481
    %v484 = vmul.f32 0.5, %v483
    %v485 = vsub.f32 1.5, %v484
    %v486 = vmul.f32 %v481, %v485
    %vm487 = vweird.f32 %v480
    %vm488 = vweird.f32 %v481
    %vm489 = vmor %vm487, %vm488
    %v490 = vsel %vm489, %v481, %v486
    %v491 = vperm.slane %v348, 1
    %v492 = vmul.f32 %v491, %v490
    %v493 = vmul.f32 %v449, %v492
    %v494 = vperm.slane %v348, 2
    %v495 = vsub.f32 %v494, %v493
    %v496 = vld [vmem:[%s2 + $0x90] sm:$0xff]
    %v497 = vld [vmem:[%s2 + $0x98] sm:$0xff]
    %v498 = vld [vmem:[%s2 + $0xa0] sm:$0xff]
    %v499 = vld [vmem:[%s2 + $0xa8] sm:$0xff]
    %v500 = vld [vmem:[%s2 + $0xb0] sm:$0xff]
    %v501 = vld [vmem:[%s2 + $0xb8] sm:$0xff]
    %503 = vrot.lane.b32.xlu0 %v495, 8
    %v504 = vpop.permute.xlu0 %503
    %v506 = vsel %vm158, %v492, %v504
    %vm507 = vcmask 15360
    %v509 = vsel %vm507, %v496, 0
    %v512 = vsel %vm507, %v497, 0
    %v515 = vsel %vm507, %v498, 0
    %v518 = vsel %vm507, %v499, 0
    %v521 = vsel %vm507, %v500, 0
    %v524 = vsel %vm507, %v501, 0
    %vm526 = vcmask 1041408
    %v528 = vsel %vm526, %v506, 0
    %530 = vmatpush.msra.mxu0 0.0
    %531 = vmatpush.msra.mxu0 0.0
    %532 = vmatpush.msra.mxu0 0.0
    %533 = vmatpush.msra.mxu0 0.0
    %534 = vmatpush.msra.mxu0 0.0
    %535 = vmatpush.msra.mxu0 0.0
    %536 = vmatpush.msra.mxu0 0.0
    %537 = vmatpush.msra.mxu0 0.0
    %538 = vmatpush.msra.mxu0 0.0
    %539 = vmatpush.msra.mxu0 0.0
    %540 = vmatpush.msra.mxu0 0.0
    %541 = vmatpush.msra.mxu0 0.0
    %542 = vmatpush.msra.mxu0 0.0
    %543 = vmatpush.msra.mxu0 0.0
    %544 = vmatpush.msra.mxu0 0.0
    %545 = vmatpush.msra.mxu0 %v528
    %546 = vmatmul.f32.gmra.mxu0 %v509
    %v547 = vpop.f32.mrf.mxu0
    %v548 = vadd.f32 0.0, %v547
    %549 = vmatmul.f32.gmra.mxu0 %v512
    %v550 = vpop.f32.mrf.mxu0
    %v551 = vadd.f32 0.0, %v550
    %552 = vmatmul.f32.gmra.mxu0 %v515
    %v553 = vpop.f32.mrf.mxu0
    %v554 = vadd.f32 0.0, %v553
    %555 = vmatmul.f32.gmra.mxu0 %v518
    %v556 = vpop.f32.mrf.mxu0
    %v557 = vadd.f32 0.0, %v556
    %558 = vmatmul.f32.gmra.mxu0 %v521
    %v559 = vpop.f32.mrf.mxu0
    %v560 = vadd.f32 0.0, %v559
    %561 = vmatmul.f32.gmra.mxu0 %v524
    %v562 = vpop.f32.mrf.mxu0
    %v563 = vadd.f32 0.0, %v562
    %564 = vdwg.mxu0
    %v565 = vmul.f32 %v420, %v548
    %v566 = vmul.f32 %v421, %v551
    %v567 = vmul.f32 %v422, %v554
    %v568 = vmul.f32 %v423, %v557
    %v569 = vmul.f32 %v424, %v560
    %v570 = vmul.f32 %v425, %v563
    %577 = vrot.lane.b32.xlu0 %v548, 120
    %v578 = vpop.permute.xlu0 %577
    %579 = vrot.lane.b32.xlu0 %v551, 120
    %v580 = vpop.permute.xlu0 %579
    %581 = vrot.lane.b32.xlu0 %v554, 120
    %v582 = vpop.permute.xlu0 %581
    %583 = vrot.lane.b32.xlu0 %v557, 120
    %v584 = vpop.permute.xlu0 %583
    %585 = vrot.lane.b32.xlu0 %v560, 120
    %v586 = vpop.permute.xlu0 %585
    %587 = vrot.lane.b32.xlu0 %v563, 120
    %v588 = vpop.permute.xlu0 %587
    %v595 = vadd.f32 %v565, %v578
    %v596 = vadd.f32 %v566, %v580
    %v597 = vadd.f32 %v567, %v582
    %v598 = vadd.f32 %v568, %v584
    %v599 = vadd.f32 %v569, %v586
    %v600 = vadd.f32 %v570, %v588
    %v601 = vld [vmem:[%s2 + $0xc0] sm:$0xff]
    %v602 = vld [vmem:[%s2 + $0xc8] sm:$0xff]
    %v603 = vld [vmem:[%s2 + $0xd0] sm:$0xff]
    %v604 = vld [vmem:[%s2 + $0xd8] sm:$0xff]
    %v605 = vld [vmem:[%s2 + $0xe0] sm:$0xff]
    %v606 = vld [vmem:[%s2 + $0xe8] sm:$0xff]
    %v613 = vrot.slane %v595, 7
    %v614 = vrot.slane %v596, 7
    %v615 = vsel %vm184, %v613, %v614
    %v616 = vrot.slane %v597, 7
    %v617 = vsel %vm184, %v614, %v616
    %v618 = vrot.slane %v598, 7
    %v619 = vsel %vm184, %v616, %v618
    %v620 = vrot.slane %v599, 7
    %v621 = vsel %vm184, %v618, %v620
    %v622 = vrot.slane %v600, 7
    %v623 = vsel %vm184, %v620, %v622
    %v630 = vsel %vm184, 0.0, %v613
    %632 = vset.pattern.permute.xlu0 0
    %633 = vperm.xlu0 %632, %v601
    %v634 = vpop.permute.xlu0 %633
    %637 = vset.pattern.permute.xlu0 0
    %638 = vperm.xlu0 %637, %v602
    %v639 = vpop.permute.xlu0 %638
    %642 = vset.pattern.permute.xlu0 0
    %643 = vperm.xlu0 %642, %v603
    %v644 = vpop.permute.xlu0 %643
    %647 = vset.pattern.permute.xlu0 0
    %648 = vperm.xlu0 %647, %v604
    %v649 = vpop.permute.xlu0 %648
    %652 = vset.pattern.permute.xlu0 0
    %653 = vperm.xlu0 %652, %v605
    %v654 = vpop.permute.xlu0 %653
    %657 = vset.pattern.permute.xlu0 0
    %658 = vperm.xlu0 %657, %v606
    %v659 = vpop.permute.xlu0 %658
    %v661 = vmul.f32 %v630, %v634
    %v662 = vmul.f32 %v615, %v639
    %v663 = vmul.f32 %v617, %v644
    %v664 = vmul.f32 %v619, %v649
    %v665 = vmul.f32 %v621, %v654
    %v666 = vmul.f32 %v623, %v659
    %v667 = vrot.slane %v595, 1
    %v668 = vrot.slane %v596, 1
    %v669 = vsel %vm239, %v667, %v668
    %v670 = vrot.slane %v597, 1
    %v671 = vsel %vm239, %v668, %v670
    %v672 = vrot.slane %v598, 1
    %v673 = vsel %vm239, %v670, %v672
    %v674 = vrot.slane %v599, 1
    %v675 = vsel %vm239, %v672, %v674
    %v676 = vrot.slane %v600, 1
    %v677 = vsel %vm239, %v674, %v676
    %v684 = vsel %vm239, %v676, 0.0
    %685 = vset.pattern.permute.xlu0 1
    %686 = vperm.xlu0 %685, %v601
    %v687 = vpop.permute.xlu0 %686
    %689 = vset.pattern.permute.xlu0 1
    %690 = vperm.xlu0 %689, %v602
    %v691 = vpop.permute.xlu0 %690
    %693 = vset.pattern.permute.xlu0 1
    %694 = vperm.xlu0 %693, %v603
    %v695 = vpop.permute.xlu0 %694
    %697 = vset.pattern.permute.xlu0 1
    %698 = vperm.xlu0 %697, %v604
    %v699 = vpop.permute.xlu0 %698
    %701 = vset.pattern.permute.xlu0 1
    %702 = vperm.xlu0 %701, %v605
    %v703 = vpop.permute.xlu0 %702
    %705 = vset.pattern.permute.xlu0 1
    %706 = vperm.xlu0 %705, %v606
    %v707 = vpop.permute.xlu0 %706
    %v709 = vmul.f32 %v669, %v687
    %v710 = vmul.f32 %v671, %v691
    %v711 = vmul.f32 %v673, %v695
    %v712 = vmul.f32 %v675, %v699
    %v713 = vmul.f32 %v677, %v703
    %v714 = vmul.f32 %v684, %v707
    %715 = vrot.lane.b32.xlu0 %v595, 8
    %v716 = vpop.permute.xlu0 %715
    %717 = vrot.lane.b32.xlu0 %v596, 8
    %v718 = vpop.permute.xlu0 %717
    %719 = vrot.lane.b32.xlu0 %v597, 8
    %v720 = vpop.permute.xlu0 %719
    %721 = vrot.lane.b32.xlu0 %v598, 8
    %v722 = vpop.permute.xlu0 %721
    %723 = vrot.lane.b32.xlu0 %v599, 8
    %v724 = vpop.permute.xlu0 %723
    %725 = vrot.lane.b32.xlu0 %v600, 8
    %v726 = vpop.permute.xlu0 %725
    %739 = vrot.lane.b32.xlu0 %v709, 16
    %v740 = vpop.permute.xlu0 %739
    %741 = vrot.lane.b32.xlu0 %v710, 16
    %v742 = vpop.permute.xlu0 %741
    %743 = vrot.lane.b32.xlu0 %v711, 16
    %v744 = vpop.permute.xlu0 %743
    %745 = vrot.lane.b32.xlu0 %v712, 16
    %v746 = vpop.permute.xlu0 %745
    %747 = vrot.lane.b32.xlu0 %v713, 16
    %v748 = vpop.permute.xlu0 %747
    %749 = vrot.lane.b32.xlu0 %v714, 16
    %v750 = vpop.permute.xlu0 %749
    %v757 = vsel %vm158, %v661, %v716
    %v758 = vsel %vm158, %v662, %v718
    %v759 = vsel %vm158, %v663, %v720
    %v760 = vsel %vm158, %v664, %v722
    %v761 = vsel %vm158, %v665, %v724
    %v762 = vsel %vm158, %v666, %v726
    %vm763 = vcmask 130048
    %v764 = vsel %vm763, %v757, %v740
    %v765 = vsel %vm763, %v758, %v742
    %v766 = vsel %vm763, %v759, %v744
    %v767 = vsel %vm763, %v760, %v746
    %v768 = vsel %vm763, %v761, %v748
    %v769 = vsel %vm763, %v762, %v750
    %v770 = vld [vmem:[%s2 + $0xf0] sm:$0xff]
    %v771 = vld [vmem:[%s2 + $0xf8] sm:$0xff]
    %v772 = vld [vmem:[%s2 + $0x100] sm:$0xff]
    %vm773 = vcmask 195584
    %v775 = vsel %vm773, %v764, 0
    %v778 = vsel %vm773, %v765, 0
    %v781 = vsel %vm773, %v766, 0
    %v784 = vsel %vm773, %v767, 0
    %v787 = vsel %vm773, %v768, 0
    %v790 = vsel %vm773, %v769, 0
    %792 = vmatpush.msra.mxu0 0.0
    %793 = vmatpush.msra.mxu0 0.0
    %794 = vmatpush.msra.mxu0 0.0
    %795 = vmatpush.msra.mxu0 0.0
    %796 = vmatpush.msra.mxu0 0.0
    %797 = vmatpush.msra.mxu0 0.0
    %798 = vmatpush.msra.mxu0 0.0
    %799 = vmatpush.msra.mxu0 0.0
    %800 = vmatpush.msra.mxu0 0.0
    %801 = vmatpush.msra.mxu0 0.0
    %802 = vmatpush.msra.mxu0 0.0
    %803 = vmatpush.msra.mxu0 0.0
    %804 = vmatpush.msra.mxu0 0.0
    %805 = vmatpush.msra.mxu0 %v772
    %806 = vmatpush.msra.mxu0 %v771
    %807 = vmatpush.msra.mxu0 %v770
    %808 = vmatmul.f32.gmra.mxu0 %v775
    %v809 = vpop.f32.mrf.mxu0
    %v810 = vadd.f32 0.0, %v809
    %811 = vmatmul.f32.gmra.mxu0 %v778
    %v812 = vpop.f32.mrf.mxu0
    %v813 = vadd.f32 0.0, %v812
    %814 = vmatmul.f32.gmra.mxu0 %v781
    %v815 = vpop.f32.mrf.mxu0
    %v816 = vadd.f32 0.0, %v815
    %817 = vmatmul.f32.gmra.mxu0 %v784
    %v818 = vpop.f32.mrf.mxu0
    %v819 = vadd.f32 0.0, %v818
    %820 = vmatmul.f32.gmra.mxu0 %v787
    %v821 = vpop.f32.mrf.mxu0
    %v822 = vadd.f32 0.0, %v821
    %823 = vmatmul.f32.gmra.mxu0 %v790
    %v824 = vpop.f32.mrf.mxu0
    %v825 = vadd.f32 0.0, %v824
    %826 = vdwg.mxu0
    %v827 = vld [vmem:[%s2 + $0x110] sm:$0xff]
    %v828 = vld [vmem:[%s2 + $0x118] sm:$0xff]
    %v829 = vld [vmem:[%s2 + $0x120] sm:$0xff]
    %v830 = vld [vmem:[%s2 + $0x108] sm:$0x7]
    %v831 = vperm.slane %v830, 0
    %v833 = vsel %vm427, %v827, 0
    %v836 = vsel %vm427, %v828, 0
    %v839 = vsel %vm427, %v829, 0
    %841 = vmatpush.msra.mxu0 0.0
    %842 = vmatpush.msra.mxu0 0.0
    %843 = vmatpush.msra.mxu0 0.0
    %844 = vmatpush.msra.mxu0 0.0
    %845 = vmatpush.msra.mxu0 0.0
    %846 = vmatpush.msra.mxu0 0.0
    %847 = vmatpush.msra.mxu0 0.0
    %848 = vmatpush.msra.mxu0 0.0
    %849 = vmatpush.msra.mxu0 0.0
    %850 = vmatpush.msra.mxu0 0.0
    %851 = vmatpush.msra.mxu0 %v825
    %852 = vmatpush.msra.mxu0 %v822
    %853 = vmatpush.msra.mxu0 %v819
    %854 = vmatpush.msra.mxu0 %v816
    %855 = vmatpush.msra.mxu0 %v813
    %856 = vmatpush.msra.mxu0 %v810
    %857 = vmatmul.f32.gmra.mxu0 %v833
    %v858 = vpop.f32.mrf.mxu0
    %v859 = vadd.f32 %v831, %v858
    %860 = vmatmul.f32.gmra.mxu0 %v836
    %v861 = vpop.f32.mrf.mxu0
    %v862 = vadd.f32 %v831, %v861
    %863 = vmatmul.f32.gmra.mxu0 %v839
    %v864 = vpop.f32.mrf.mxu0
    %v865 = vadd.f32 %v831, %v864
    %866 = vdwg.mxu0
    %vm867 = vcmp.ge.f32.partialorder %v859, 0.0
    %vm868 = vcmp.ge.f32.partialorder %v862, 0.0
    %vm869 = vcmp.ge.f32.partialorder %v865, 0.0
    %v870 = vmul.f32 %v859, 0.3
    %v871 = vmul.f32 %v862, 0.3
    %v872 = vmul.f32 %v865, 0.3
    %v873 = vsel %vm867, %v859, %v870
    %v874 = vsel %vm868, %v862, %v871
    %v875 = vsel %vm869, %v865, %v872
    %v876 = vld [vmem:[%s2 + $0x128] sm:$0x3]
    %v878 = vsel %vm773, %v876, 0
    %880 = vmatpush.msra.mxu0 0.0
    %881 = vmatpush.msra.mxu0 0.0
    %882 = vmatpush.msra.mxu0 0.0
    %883 = vmatpush.msra.mxu0 0.0
    %884 = vmatpush.msra.mxu0 0.0
    %885 = vmatpush.msra.mxu0 0.0
    %886 = vmatpush.msra.mxu0 0.0
    %887 = vmatpush.msra.mxu0 0.0
    %888 = vmatpush.msra.mxu0 0.0
    %889 = vmatpush.msra.mxu0 0.0
    %890 = vmatpush.msra.mxu0 0.0
    %891 = vmatpush.msra.mxu0 0.0
    %892 = vmatpush.msra.mxu0 0.0
    %893 = vmatpush.msra.mxu0 %v875
    %894 = vmatpush.msra.mxu0 %v874
    %895 = vmatpush.msra.mxu0 %v873
    %896 = vmatmul.f32.gmra.mxu0 %v878
    %v897 = vpop.f32.mrf.mxu0
    %v898 = vadd.f32 0.0, %v897
    %899 = vdwg.mxu0
    %v900 = vmul.f32 %v873, %v873
    %v901 = vmul.f32 %v874, %v874
    %v902 = vmul.f32 %v875, %v875
    %903 = vmatpush.msra.mxu0 0.0
    %904 = vmatpush.msra.mxu0 0.0
    %905 = vmatpush.msra.mxu0 0.0
    %906 = vmatpush.msra.mxu0 0.0
    %907 = vmatpush.msra.mxu0 0.0
    %908 = vmatpush.msra.mxu0 0.0
    %909 = vmatpush.msra.mxu0 0.0
    %910 = vmatpush.msra.mxu0 0.0
    %911 = vmatpush.msra.mxu0 0.0
    %912 = vmatpush.msra.mxu0 0.0
    %913 = vmatpush.msra.mxu0 0.0
    %914 = vmatpush.msra.mxu0 0.0
    %915 = vmatpush.msra.mxu0 0.0
    %916 = vmatpush.msra.mxu0 %v902
    %917 = vmatpush.msra.mxu0 %v901
    %918 = vmatpush.msra.mxu0 %v900
    %919 = vmatmul.f32.gmra.mxu0 %v878
    %v920 = vpop.f32.mrf.mxu0
    %v921 = vadd.f32 0.0, %v920
    %922 = vdwg.mxu0
    %v923 = vmul.f32 %v898, %v898
    %v924 = vsub.f32 %v921, %v923
    %v925 = vmax.f32 %v924, 0.0
    %v926 = vadd.f32 %v925, 1e-05
    %v927 = vrsqrt.pop %v926
    %v928 = vmul.f32 %v927, %v926
    %v929 = vmul.f32 %v928, %v927
    %v930 = vmul.f32 0.5, %v929
    %v931 = vsub.f32 1.5, %v930
    %v932 = vmul.f32 %v927, %v931
    %vm933 = vweird.f32 %v926
    %vm934 = vweird.f32 %v927
    %vm935 = vmor %vm933, %vm934
    %v936 = vsel %vm935, %v927, %v932
    %v937 = vperm.slane %v830, 1
    %v938 = vmul.f32 %v937, %v936
    %v939 = vmul.f32 %v898, %v938
    %v940 = vperm.slane %v830, 2
    %v941 = vsub.f32 %v940, %v939
    %v942 = vld [vmem:[%s2 + $0x130] sm:$0xff]
    %v943 = vld [vmem:[%s2 + $0x138] sm:$0xff]
    %v944 = vld [vmem:[%s2 + $0x140] sm:$0xff]
    %946 = vrot.lane.b32.xlu0 %v941, 8
    %v947 = vpop.permute.xlu0 %946
    %v949 = vsel %vm158, %v938, %v947
    %v951 = vsel %vm507, %v942, 0
    %v954 = vsel %vm507, %v943, 0
    %v957 = vsel %vm507, %v944, 0
    %v960 = vsel %vm526, %v949, 0
    %962 = vmatpush.msra.mxu0 0.0
    %963 = vmatpush.msra.mxu0 0.0
    %964 = vmatpush.msra.mxu0 0.0
    %965 = vmatpush.msra.mxu0 0.0
    %966 = vmatpush.msra.mxu0 0.0
    %967 = vmatpush.msra.mxu0 0.0
    %968 = vmatpush.msra.mxu0 0.0
    %969 = vmatpush.msra.mxu0 0.0
    %970 = vmatpush.msra.mxu0 0.0
    %971 = vmatpush.msra.mxu0 0.0
    %972 = vmatpush.msra.mxu0 0.0
    %973 = vmatpush.msra.mxu0 0.0
    %974 = vmatpush.msra.mxu0 0.0
    %975 = vmatpush.msra.mxu0 0.0
    %976 = vmatpush.msra.mxu0 0.0
    %977 = vmatpush.msra.mxu0 %v960
    %978 = vmatmul.f32.gmra.mxu0 %v951
    %v979 = vpop.f32.mrf.mxu0
    %v980 = vadd.f32 0.0, %v979
    %981 = vmatmul.f32.gmra.mxu0 %v954
    %v982 = vpop.f32.mrf.mxu0
    %v983 = vadd.f32 0.0, %v982
    %984 = vmatmul.f32.gmra.mxu0 %v957
    %v985 = vpop.f32.mrf.mxu0
    %v986 = vadd.f32 0.0, %v985
    %987 = vdwg.mxu0
    %v988 = vmul.f32 %v873, %v980
    %v989 = vmul.f32 %v874, %v983
    %v990 = vmul.f32 %v875, %v986
    %994 = vrot.lane.b32.xlu0 %v980, 120
    %v995 = vpop.permute.xlu0 %994
    %996 = vrot.lane.b32.xlu0 %v983, 120
    %v997 = vpop.permute.xlu0 %996
    %998 = vrot.lane.b32.xlu0 %v986, 120
    %v999 = vpop.permute.xlu0 %998
    %v1003 = vadd.f32 %v988, %v995
    %v1004 = vadd.f32 %v989, %v997
    %v1005 = vadd.f32 %v990, %v999
    %v1006 = vld [vmem:[%s2 + $0x148] sm:$0xff]
    %v1007 = vld [vmem:[%s2 + $0x150] sm:$0xff]
    %v1008 = vld [vmem:[%s2 + $0x158] sm:$0xff]
    %v1012 = vrot.slane %v1003, 7
    %v1013 = vrot.slane %v1004, 7
    %v1014 = vsel %vm184, %v1012, %v1013
    %v1015 = vrot.slane %v1005, 7
    %v1016 = vsel %vm184, %v1013, %v1015
    %v1020 = vsel %vm184, 0.0, %v1012
    %1022 = vset.pattern.permute.xlu0 0
    %1023 = vperm.xlu0 %1022, %v1006
    %v1024 = vpop.permute.xlu0 %1023
    %1027 = vset.pattern.permute.xlu0 0
    %1028 = vperm.xlu0 %1027, %v1007
    %v1029 = vpop.permute.xlu0 %1028
    %1032 = vset.pattern.permute.xlu0 0
    %1033 = vperm.xlu0 %1032, %v1008
    %v1034 = vpop.permute.xlu0 %1033
    %v1036 = vmul.f32 %v1020, %v1024
    %v1037 = vmul.f32 %v1014, %v1029
    %v1038 = vmul.f32 %v1016, %v1034
    %v1039 = vrot.slane %v1003, 1
    %v1040 = vrot.slane %v1004, 1
    %v1041 = vsel %vm239, %v1039, %v1040
    %v1042 = vrot.slane %v1005, 1
    %v1043 = vsel %vm239, %v1040, %v1042
    %v1047 = vsel %vm239, %v1042, 0.0
    %1048 = vset.pattern.permute.xlu0 1
    %1049 = vperm.xlu0 %1048, %v1006
    %v1050 = vpop.permute.xlu0 %1049
    %1052 = vset.pattern.permute.xlu0 1
    %1053 = vperm.xlu0 %1052, %v1007
    %v1054 = vpop.permute.xlu0 %1053
    %1056 = vset.pattern.permute.xlu0 1
    %1057 = vperm.xlu0 %1056, %v1008
    %v1058 = vpop.permute.xlu0 %1057
    %v1060 = vmul.f32 %v1041, %v1050
    %v1061 = vmul.f32 %v1043, %v1054
    %v1062 = vmul.f32 %v1047, %v1058
    %1063 = vrot.lane.b32.xlu0 %v1003, 8
    %v1064 = vpop.permute.xlu0 %1063
    %1065 = vrot.lane.b32.xlu0 %v1004, 8
    %v1066 = vpop.permute.xlu0 %1065
    %1067 = vrot.lane.b32.xlu0 %v1005, 8
    %v1068 = vpop.permute.xlu0 %1067
    %1075 = vrot.lane.b32.xlu0 %v1060, 16
    %v1076 = vpop.permute.xlu0 %1075
    %1077 = vrot.lane.b32.xlu0 %v1061, 16
    %v1078 = vpop.permute.xlu0 %1077
    %1079 = vrot.lane.b32.xlu0 %v1062, 16
    %v1080 = vpop.permute.xlu0 %1079
    %v1084 = vsel %vm158, %v1036, %v1064
    %v1085 = vsel %vm158, %v1037, %v1066
    %v1086 = vsel %vm158, %v1038, %v1068
    %v1087 = vsel %vm763, %v1084, %v1076
    %v1088 = vsel %vm763, %v1085, %v1078
    %v1089 = vsel %vm763, %v1086, %v1080
    %v1090 = vld [vmem:[%s2 + $0x160] sm:$0xff]
    %v1091 = vld [vmem:[%s2 + $0x168] sm:$0xff]
    %v1092 = vld [vmem:[%s2 + $0x170] sm:$0xff]
    %v1094 = vsel %vm773, %v1087, 0
    %v1097 = vsel %vm773, %v1088, 0
    %v1100 = vsel %vm773, %v1089, 0
    %1102 = vmatpush.msra.mxu0 0.0
    %1103 = vmatpush.msra.mxu0 0.0
    %1104 = vmatpush.msra.mxu0 0.0
    %1105 = vmatpush.msra.mxu0 0.0
    %1106 = vmatpush.msra.mxu0 0.0
    %1107 = vmatpush.msra.mxu0 0.0
    %1108 = vmatpush.msra.mxu0 0.0
    %1109 = vmatpush.msra.mxu0 0.0
    %1110 = vmatpush.msra.mxu0 0.0
    %1111 = vmatpush.msra.mxu0 0.0
    %1112 = vmatpush.msra.mxu0 0.0
    %1113 = vmatpush.msra.mxu0 0.0
    %1114 = vmatpush.msra.mxu0 0.0
    %1115 = vmatpush.msra.mxu0 %v1092
    %1116 = vmatpush.msra.mxu0 %v1091
    %1117 = vmatpush.msra.mxu0 %v1090
    %1118 = vmatmul.f32.gmra.mxu0 %v1094
    %v1119 = vpop.f32.mrf.mxu0
    %v1120 = vadd.f32 0.0, %v1119
    %1121 = vmatmul.f32.gmra.mxu0 %v1097
    %v1122 = vpop.f32.mrf.mxu0
    %v1123 = vadd.f32 0.0, %v1122
    %1124 = vmatmul.f32.gmra.mxu0 %v1100
    %v1125 = vpop.f32.mrf.mxu0
    %v1126 = vadd.f32 0.0, %v1125
    %1127 = vdwg.mxu0
    %v1128 = vld [vmem:[%s2 + $0x180] sm:$0xff]
    %v1129 = vld [vmem:[%s2 + $0x188] sm:$0xf]
    %v1130 = vld [vmem:[%s2 + $0x178] sm:$0x7]
    %v1131 = vperm.slane %v1130, 0
    %v1133 = vsel %vm773, %v1128, 0
    %v1136 = vsel %vm773, %v1129, 0
    %1138 = vmatpush.msra.mxu0 0.0
    %1139 = vmatpush.msra.mxu0 0.0
    %1140 = vmatpush.msra.mxu0 0.0
    %1141 = vmatpush.msra.mxu0 0.0
    %1142 = vmatpush.msra.mxu0 0.0
    %1143 = vmatpush.msra.mxu0 0.0
    %1144 = vmatpush.msra.mxu0 0.0
    %1145 = vmatpush.msra.mxu0 0.0
    %1146 = vmatpush.msra.mxu0 0.0
    %1147 = vmatpush.msra.mxu0 0.0
    %1148 = vmatpush.msra.mxu0 0.0
    %1149 = vmatpush.msra.mxu0 0.0
    %1150 = vmatpush.msra.mxu0 0.0
    %1151 = vmatpush.msra.mxu0 %v1126
    %1152 = vmatpush.msra.mxu0 %v1123
    %1153 = vmatpush.msra.mxu0 %v1120
    %1154 = vmatmul.f32.gmra.mxu0 %v1133
    %v1155 = vpop.f32.mrf.mxu0
    %v1156 = vadd.f32 %v1131, %v1155
    %1157 = vmatmul.f32.gmra.mxu0 %v1136
    %v1158 = vpop.f32.mrf.mxu0
    %v1159 = vadd.f32 %v1131, %v1158
    %1160 = vdwg.mxu0
    %vm1161 = vcmp.ge.f32.partialorder %v1156, 0.0
    %vm1162 = vcmp.ge.f32.partialorder %v1159, 0.0
    %v1163 = vmul.f32 %v1156, 0.3
    %v1164 = vmul.f32 %v1159, 0.3
    %v1165 = vsel %vm1161, %v1156, %v1163
    %v1166 = vsel %vm1162, %v1159, %v1164
    %v1167 = vld [vmem:[%s2 + $0x190] sm:$0x3]
    %vm1168 = vcmask 97280
    %v1170 = vsel %vm1168, %v1167, 0
    %vm1172 = vcmask 1043456
    %v1174 = vsel %vm1172, %v1166, 0
    %1176 = vmatpush.msra.mxu0 0.0
    %1177 = vmatpush.msra.mxu0 0.0
    %1178 = vmatpush.msra.mxu0 0.0
    %1179 = vmatpush.msra.mxu0 0.0
    %1180 = vmatpush.msra.mxu0 0.0
    %1181 = vmatpush.msra.mxu0 0.0
    %1182 = vmatpush.msra.mxu0 0.0
    %1183 = vmatpush.msra.mxu0 0.0
    %1184 = vmatpush.msra.mxu0 0.0
    %1185 = vmatpush.msra.mxu0 0.0
    %1186 = vmatpush.msra.mxu0 0.0
    %1187 = vmatpush.msra.mxu0 0.0
    %1188 = vmatpush.msra.mxu0 0.0
    %1189 = vmatpush.msra.mxu0 0.0
    %1190 = vmatpush.msra.mxu0 %v1174
    %1191 = vmatpush.msra.mxu0 %v1165
    %1192 = vmatmul.f32.gmra.mxu0 %v1170
    %v1193 = vpop.f32.mrf.mxu0
    %v1194 = vadd.f32 0.0, %v1193
    %1195 = vdwg.mxu0
    %v1196 = vmul.f32 %v1165, %v1165
    %v1197 = vmul.f32 %v1166, %v1166
    %v1199 = vsel %vm1172, %v1197, 0
    %1201 = vmatpush.msra.mxu0 0.0
    %1202 = vmatpush.msra.mxu0 0.0
    %1203 = vmatpush.msra.mxu0 0.0
    %1204 = vmatpush.msra.mxu0 0.0
    %1205 = vmatpush.msra.mxu0 0.0
    %1206 = vmatpush.msra.mxu0 0.0
    %1207 = vmatpush.msra.mxu0 0.0
    %1208 = vmatpush.msra.mxu0 0.0
    %1209 = vmatpush.msra.mxu0 0.0
    %1210 = vmatpush.msra.mxu0 0.0
    %1211 = vmatpush.msra.mxu0 0.0
    %1212 = vmatpush.msra.mxu0 0.0
    %1213 = vmatpush.msra.mxu0 0.0
    %1214 = vmatpush.msra.mxu0 0.0
    %1215 = vmatpush.msra.mxu0 %v1199
    %1216 = vmatpush.msra.mxu0 %v1196
    %1217 = vmatmul.f32.gmra.mxu0 %v1170
    %v1218 = vpop.f32.mrf.mxu0
    %v1219 = vadd.f32 0.0, %v1218
    %1220 = vdwg.mxu0
    %v1221 = vmul.f32 %v1194, %v1194
    %v1222 = vsub.f32 %v1219, %v1221
    %v1223 = vmax.f32 %v1222, 0.0
    %v1224 = vadd.f32 %v1223, 1e-05
    %v1225 = vrsqrt.pop %v1224
    %v1226 = vmul.f32 %v1225, %v1224
    %v1227 = vmul.f32 %v1226, %v1225
    %v1228 = vmul.f32 0.5, %v1227
    %v1229 = vsub.f32 1.5, %v1228
    %v1230 = vmul.f32 %v1225, %v1229
    %vm1231 = vweird.f32 %v1224
    %vm1232 = vweird.f32 %v1225
    %vm1233 = vmor %vm1231, %vm1232
    %v1234 = vsel %vm1233, %v1225, %v1230
    %v1235 = vperm.slane %v1130, 1
    %v1236 = vmul.f32 %v1235, %v1234
    %v1237 = vmul.f32 %v1194, %v1236
    %v1238 = vperm.slane %v1130, 2
    %v1239 = vsub.f32 %v1238, %v1237
    %v1240 = vld [vmem:[%s2 + $0x198] sm:$0xff]
    %v1241 = vld [vmem:[%s2 + $0x1a0] sm:$0xf]
    %1243 = vrot.lane.b32.xlu0 %v1239, 16
    %v1244 = vpop.permute.xlu0 %1243
    %v1246 = vsel %vm763, %v1236, %v1244
    %v1248 = vsel %vm507, %v1240, 0
    %v1251 = vsel %vm507, %v1241, 0
    %v1254 = vsel %vm526, %v1246, 0
    %1256 = vmatpush.msra.mxu0 0.0
    %1257 = vmatpush.msra.mxu0 0.0
    %1258 = vmatpush.msra.mxu0 0.0
    %1259 = vmatpush.msra.mxu0 0.0
    %1260 = vmatpush.msra.mxu0 0.0
    %1261 = vmatpush.msra.mxu0 0.0
    %1262 = vmatpush.msra.mxu0 0.0
    %1263 = vmatpush.msra.mxu0 0.0
    %1264 = vmatpush.msra.mxu0 0.0
    %1265 = vmatpush.msra.mxu0 0.0
    %1266 = vmatpush.msra.mxu0 0.0
    %1267 = vmatpush.msra.mxu0 0.0
    %1268 = vmatpush.msra.mxu0 0.0
    %1269 = vmatpush.msra.mxu0 0.0
    %1270 = vmatpush.msra.mxu0 0.0
    %1271 = vmatpush.msra.mxu0 %v1254
    %1272 = vmatmul.f32.gmra.mxu0 %v1248
    %v1273 = vpop.f32.mrf.mxu0
    %v1274 = vadd.f32 0.0, %v1273
    %1275 = vmatmul.f32.gmra.mxu0 %v1251
    %v1276 = vpop.f32.mrf.mxu0
    %v1277 = vadd.f32 0.0, %v1276
    %1278 = vdwg.mxu0
    %v1279 = vmul.f32 %v1165, %v1274
    %v1280 = vmul.f32 %v1166, %v1277
    %1283 = vrot.lane.b32.xlu0 %v1274, 112
    %v1284 = vpop.permute.xlu0 %1283
    %1285 = vrot.lane.b32.xlu0 %v1277, 112
    %v1286 = vpop.permute.xlu0 %1285
    %v1289 = vadd.f32 %v1279, %v1284
    %v1290 = vadd.f32 %v1280, %v1286
    %v1291 = vld [vmem:[%s2 + $0x1b8] sm:$0xff]
    %v1292 = vld [vmem:[%s2 + $0x1c0] sm:$0xff]
    %v1293 = vld [vmem:[%s2 + $0x1c8] sm:$0x3]
    %v1294 = vld [vmem:[%s2 + $0x1a8] sm:$0xff]
    %v1295 = vld [vmem:[%s2 + $0x1b0] sm:$0xff]
    %v1296 = vperm.slane %v1293, 0
    %v1298 = vsel %vm763, %v1289, 0
    %v1301 = vsel %vm763, %v1290, 0
    %1303 = vmatpush.msra.mxu0 0.0
    %1304 = vmatpush.msra.mxu0 0.0
    %1305 = vmatpush.msra.mxu0 0.0
    %1306 = vmatpush.msra.mxu0 0.0
    %1307 = vmatpush.msra.mxu0 0.0
    %1308 = vmatpush.msra.mxu0 0.0
    %1309 = vmatpush.msra.mxu0 0.0
    %1310 = vmatpush.msra.mxu0 0.0
    %1311 = vmatpush.msra.mxu0 0.0
    %1312 = vmatpush.msra.mxu0 0.0
    %1313 = vmatpush.msra.mxu0 0.0
    %1314 = vmatpush.msra.mxu0 0.0
    %1315 = vmatpush.msra.mxu0 0.0
    %1316 = vmatpush.msra.mxu0 0.0
    %1317 = vmatpush.msra.mxu0 %v1295
    %1318 = vmatpush.msra.mxu0 %v1294
    %1319 = vmatmul.f32.gmra.mxu0 %v1298
    %v1320 = vpop.f32.mrf.mxu0
    %v1321 = vadd.f32 %v1296, %v1320
    %1322 = vmatmul.f32.gmra.mxu0 %v1301
    %v1323 = vpop.f32.mrf.mxu0
    %v1324 = vadd.f32 %v1296, %v1323
    %1325 = vdwg.mxu0
    %v1326 = vlaneseq
    %v1327 = vshrl.u32 %v1326, 7
    %vm1328 = vcmp.eq.s32.totalorder %v1327, 0
    %v1329 = vsel %vm1328, %v41, 0.0
    %vm1330 = vcmp.eq.s32.totalorder %v1327, 1
    %v1331 = vsel %vm1330, %v55, %v1329
    %v1332 = vperm.slane %v1293, 1
    %v1334 = vsel %vm763, 0.0, 0
    %1336 = vmatpush.msra.mxu0 0.0
    %1337 = vmatpush.msra.mxu0 0.0
    %1338 = vmatpush.msra.mxu0 0.0
    %1339 = vmatpush.msra.mxu0 0.0
    %1340 = vmatpush.msra.mxu0 0.0
    %1341 = vmatpush.msra.mxu0 0.0
    %1342 = vmatpush.msra.mxu0 0.0
    %1343 = vmatpush.msra.mxu0 0.0
    %1344 = vmatpush.msra.mxu0 0.0
    %1345 = vmatpush.msra.mxu0 0.0
    %1346 = vmatpush.msra.mxu0 0.0
    %1347 = vmatpush.msra.mxu0 0.0
    %1348 = vmatpush.msra.mxu0 0.0
    %1349 = vmatpush.msra.mxu0 0.0
    %1350 = vmatpush.msra.mxu0 %v1292
    %1351 = vmatpush.msra.mxu0 %v1291
    %1352 = vmatmul.f32.gmra.mxu0 %v1334
    %v1353 = vpop.f32.mrf.mxu0
    %v1354 = vadd.f32 %v1332, %v1353
    %1355 = vdwg.mxu0
    %v1356 = vadd.f32 %v1321, %v1354
    %v1357 = vxor.u32 %v1356, 2147483648
    %v1358 = vmul.f32 %v1357, 1.442695
    %v1359 = vpow.pop %v1358
    %v1360 = vadd.f32 %v1359, 1.0
    %v1361 = vrcp.pop %v1360
    %v1362 = vmul.f32 %v1360, %v1361
    %v1363 = vsub.f32 1.0, %v1362
    %v1364 = vmul.f32 %v1361, %v1363
    %v1365 = vadd.f32 %v1361, %v1364
    %vm1366 = vweird.f32 %v1360
    %vm1367 = vweird.f32 %v1361
    %vm1368 = vmor %vm1366, %vm1367
    %v1369 = vsel %vm1368, %v1361, %v1365
    %v1370 = vand.u32 2147483647, %v1360
    %vm1371 = vcmp.eq.f32.partialorder %v1370, 8.507059e+37
    %v1372 = vand.u32 %v1360, 2147483648
    %v1373 = vor.u32 1.1754944e-38, %v1372
    %v1374 = vsel %vm1371, %v1373, %v1369
    %v1375 = vmul.f32 1.0, %v1374
    %1377 = vrot.lane.b32.xlu0 %v1354, 96
    %v1378 = vpop.permute.xlu0 %1377
    %v1380 = vmul.f32 %v1375, %v1378
    %1382 = vrot.lane.b32.xlu0 %v1380, 32
    %v1383 = vpop.permute.xlu0 %1382
    %v1385 = vadd.f32 %v1321, %v1383
    %v1386 = vtanh.pop %v1385
    %v1387 = vsub.f32 1.0, %v1375
    %1389 = vrot.lane.b32.xlu0 %v1386, 112
    %v1390 = vpop.permute.xlu0 %1389
    %v1392 = vmul.f32 %v1387, %v1390
    %v1393 = vmul.f32 %v1375, 0.0
    %v1394 = vadd.f32 %v1392, %v1393
    %vm1395 = vcmp.gt.f32.partialorder %v1331, 0.0
    %v1396 = vsel %vm1395, 1, 0
    %vm1397 = vcmp.eq.s32.totalorder %v1396, 1
    %v1398 = vsel %vm1397, %v1394, 0.0
    %1400 = vrot.lane.b32.xlu0 %v1398, 112
    %v1401 = vpop.permute.xlu0 %1400
    %v1402 = vsel %vm763, %v1401, 0
    %1404 = vmatpush.msra.mxu0 0.0
    %1405 = vmatpush.msra.mxu0 0.0
    %1406 = vmatpush.msra.mxu0 0.0
    %1407 = vmatpush.msra.mxu0 0.0
    %1408 = vmatpush.msra.mxu0 0.0
    %1409 = vmatpush.msra.mxu0 0.0
    %1410 = vmatpush.msra.mxu0 0.0
    %1411 = vmatpush.msra.mxu0 0.0
    %1412 = vmatpush.msra.mxu0 0.0
    %1413 = vmatpush.msra.mxu0 0.0
    %1414 = vmatpush.msra.mxu0 0.0
    %1415 = vmatpush.msra.mxu0 0.0
    %1416 = vmatpush.msra.mxu0 0.0
    %1417 = vmatpush.msra.mxu0 0.0
    %1418 = vmatpush.msra.mxu0 %v1292
    %1419 = vmatpush.msra.mxu0 %v1291
    %1420 = vmatmul.f32.gmra.mxu0 %v1402
    %v1421 = vpop.f32.mrf.mxu0
    %v1422 = vadd.f32 %v1332, %v1421
    %1423 = vdwg.mxu0
    %v1425 = vrot.slane %v1422, 6
    %v1427 = vadd.f32 %v1321, %v1425
    %v1428 = vxor.u32 %v1427, 2147483648
    %v1429 = vmul.f32 %v1428, 1.442695
    %v1430 = vpow.pop %v1429
    %v1431 = vadd.f32 %v1430, 1.0
    %v1432 = vrcp.pop %v1431
    %v1433 = vmul.f32 %v1431, %v1432
    %v1434 = vsub.f32 1.0, %v1433
    %v1435 = vmul.f32 %v1432, %v1434
    %v1436 = vadd.f32 %v1432, %v1435
    %vm1437 = vweird.f32 %v1431
    %vm1438 = vweird.f32 %v1432
    %vm1439 = vmor %vm1437, %vm1438
    %v1440 = vsel %vm1439, %v1432, %v1436
    %v1441 = vand.u32 2147483647, %v1431
    %vm1442 = vcmp.eq.f32.partialorder %v1441, 8.507059e+37
    %v1443 = vand.u32 %v1431, 2147483648
    %v1444 = vor.u32 1.1754944e-38, %v1443
    %v1445 = vsel %vm1442, %v1444, %v1440
    %v1446 = vmul.f32 1.0, %v1445
    %1447 = vrot.lane.b32.xlu0 %v1425, 96
    %v1448 = vpop.permute.xlu0 %1447
    %v1450 = vmul.f32 %v1446, %v1448
    %1452 = vrot.lane.b32.xlu0 %v1450, 32
    %v1453 = vpop.permute.xlu0 %1452
    %v1455 = vadd.f32 %v1321, %v1453
    %v1456 = vtanh.pop %v1455
    %v1457 = vsub.f32 1.0, %v1446
    %1459 = vrot.lane.b32.xlu0 %v1456, 112
    %v1460 = vpop.permute.xlu0 %1459
    %v1462 = vmul.f32 %v1457, %v1460
    %v1463 = vrot.slane %v1398, 6
    %v1465 = vmul.f32 %v1446, %v1463
    %v1466 = vadd.f32 %v1462, %v1465
    %vm1467 = vcmp.gt.f32.partialorder %v1331, 4.0
    %v1468 = vsel %vm1467, 1, 0
    %vm1469 = vcmp.eq.s32.totalorder %v1468, 1
    %v1471 = vrot.slane %v1466, 2
    %1472 = vrot.lane.b32.xlu0 %v1471, 112
    %v1473 = vpop.permute.xlu0 %1472
    %v1476 = vsel %vm1469, %v1473, %v1401
    %v1478 = vsel %vm763, %v1476, 0
    %1480 = vmatpush.msra.mxu0 0.0
    %1481 = vmatpush.msra.mxu0 0.0
    %1482 = vmatpush.msra.mxu0 0.0
    %1483 = vmatpush.msra.mxu0 0.0
    %1484 = vmatpush.msra.mxu0 0.0
    %1485 = vmatpush.msra.mxu0 0.0
    %1486 = vmatpush.msra.mxu0 0.0
    %1487 = vmatpush.msra.mxu0 0.0
    %1488 = vmatpush.msra.mxu0 0.0
    %1489 = vmatpush.msra.mxu0 0.0
    %1490 = vmatpush.msra.mxu0 0.0
    %1491 = vmatpush.msra.mxu0 0.0
    %1492 = vmatpush.msra.mxu0 0.0
    %1493 = vmatpush.msra.mxu0 0.0
    %1494 = vmatpush.msra.mxu0 %v1292
    %1495 = vmatpush.msra.mxu0 %v1291
    %1496 = vmatmul.f32.gmra.mxu0 %v1478
    %v1497 = vpop.f32.mrf.mxu0
    %v1498 = vadd.f32 %v1332, %v1497
    %1499 = vdwg.mxu0
    %v1501 = vrot.slane %v1498, 4
    %v1503 = vadd.f32 %v1321, %v1501
    %v1504 = vxor.u32 %v1503, 2147483648
    %v1505 = vmul.f32 %v1504, 1.442695
    %v1506 = vpow.pop %v1505
    %v1507 = vadd.f32 %v1506, 1.0
    %v1508 = vrcp.pop %v1507
    %v1509 = vmul.f32 %v1507, %v1508
    %v1510 = vsub.f32 1.0, %v1509
    %v1511 = vmul.f32 %v1508, %v1510
    %v1512 = vadd.f32 %v1508, %v1511
    %vm1513 = vweird.f32 %v1507
    %vm1514 = vweird.f32 %v1508
    %vm1515 = vmor %vm1513, %vm1514
    %v1516 = vsel %vm1515, %v1508, %v1512
    %v1517 = vand.u32 2147483647, %v1507
    %vm1518 = vcmp.eq.f32.partialorder %v1517, 8.507059e+37
    %v1519 = vand.u32 %v1507, 2147483648
    %v1520 = vor.u32 1.1754944e-38, %v1519
    %v1521 = vsel %vm1518, %v1520, %v1516
    %v1522 = vmul.f32 1.0, %v1521
    %1523 = vrot.lane.b32.xlu0 %v1501, 96
    %v1524 = vpop.permute.xlu0 %1523
    %v1526 = vmul.f32 %v1522, %v1524
    %1528 = vrot.lane.b32.xlu0 %v1526, 32
    %v1529 = vpop.permute.xlu0 %1528
    %v1531 = vadd.f32 %v1321, %v1529
    %v1532 = vtanh.pop %v1531
    %v1533 = vsub.f32 1.0, %v1522
    %1535 = vrot.lane.b32.xlu0 %v1532, 112
    %v1536 = vpop.permute.xlu0 %1535
    %v1538 = vmul.f32 %v1533, %v1536
    %v1539 = vrot.slane %v1476, 4
    %1540 = vrot.lane.b32.xlu0 %v1539, 16
    %v1541 = vpop.permute.xlu0 %1540
    %v1543 = vmul.f32 %v1522, %v1541
    %v1544 = vadd.f32 %v1538, %v1543
    %vm1545 = vcmp.gt.f32.partialorder %v1331, 8.0
    %v1546 = vsel %vm1545, 1, 0
    %vm1547 = vcmp.eq.s32.totalorder %v1546, 1
    %v1549 = vrot.slane %v1544, 4
    %1550 = vrot.lane.b32.xlu0 %v1549, 112
    %v1551 = vpop.permute.xlu0 %1550
    %v1553 = vsel %vm1547, %v1551, %v1476
    %v1555 = vsel %vm763, %v1553, 0
    %1557 = vmatpush.msra.mxu0 0.0
    %1558 = vmatpush.msra.mxu0 0.0
    %1559 = vmatpush.msra.mxu0 0.0
    %1560 = vmatpush.msra.mxu0 0.0
    %1561 = vmatpush.msra.mxu0 0.0
    %1562 = vmatpush.msra.mxu0 0.0
    %1563 = vmatpush.msra.mxu0 0.0
    %1564 = vmatpush.msra.mxu0 0.0
    %1565 = vmatpush.msra.mxu0 0.0
    %1566 = vmatpush.msra.mxu0 0.0
    %1567 = vmatpush.msra.mxu0 0.0
    %1568 = vmatpush.msra.mxu0 0.0
    %1569 = vmatpush.msra.mxu0 0.0
    %1570 = vmatpush.msra.mxu0 0.0
    %1571 = vmatpush.msra.mxu0 %v1292
    %1572 = vmatpush.msra.mxu0 %v1291
    %1573 = vmatmul.f32.gmra.mxu0 %v1555
    %v1574 = vpop.f32.mrf.mxu0
    %v1575 = vadd.f32 %v1332, %v1574
    %1576 = vdwg.mxu0
    %v1578 = vrot.slane %v1575, 2
    %v1580 = vadd.f32 %v1321, %v1578
    %v1581 = vxor.u32 %v1580, 2147483648
    %v1582 = vmul.f32 %v1581, 1.442695
    %v1583 = vpow.pop %v1582
    %v1584 = vadd.f32 %v1583, 1.0
    %v1585 = vrcp.pop %v1584
    %v1586 = vmul.f32 %v1584, %v1585
    %v1587 = vsub.f32 1.0, %v1586
    %v1588 = vmul.f32 %v1585, %v1587
    %v1589 = vadd.f32 %v1585, %v1588
    %vm1590 = vweird.f32 %v1584
    %vm1591 = vweird.f32 %v1585
    %vm1592 = vmor %vm1590, %vm1591
    %v1593 = vsel %vm1592, %v1585, %v1589
    %v1594 = vand.u32 2147483647, %v1584
    %vm1595 = vcmp.eq.f32.partialorder %v1594, 8.507059e+37
    %v1596 = vand.u32 %v1584, 2147483648
    %v1597 = vor.u32 1.1754944e-38, %v1596
    %v1598 = vsel %vm1595, %v1597, %v1593
    %v1599 = vmul.f32 1.0, %v1598
    %1600 = vrot.lane.b32.xlu0 %v1578, 96
    %v1601 = vpop.permute.xlu0 %1600
    %v1603 = vmul.f32 %v1599, %v1601
    %1605 = vrot.lane.b32.xlu0 %v1603, 32
    %v1606 = vpop.permute.xlu0 %1605
    %v1608 = vadd.f32 %v1321, %v1606
    %v1609 = vtanh.pop %v1608
    %v1610 = vsub.f32 1.0, %v1599
    %1612 = vrot.lane.b32.xlu0 %v1609, 112
    %v1613 = vpop.permute.xlu0 %1612
    %v1615 = vmul.f32 %v1610, %v1613
    %v1616 = vrot.slane %v1553, 2
    %1617 = vrot.lane.b32.xlu0 %v1616, 16
    %v1618 = vpop.permute.xlu0 %1617
    %v1620 = vmul.f32 %v1599, %v1618
    %v1621 = vadd.f32 %v1615, %v1620
    %vm1622 = vcmp.gt.f32.partialorder %v1331, 12.0
    %v1623 = vsel %vm1622, 1, 0
    %vm1624 = vcmp.eq.s32.totalorder %v1623, 1
    %v1626 = vrot.slane %v1621, 6
    %1627 = vrot.lane.b32.xlu0 %v1626, 112
    %v1628 = vpop.permute.xlu0 %1627
    %v1630 = vsel %vm1624, %v1628, %v1553
    %v1632 = vsel %vm763, %v1630, 0
    %1634 = vmatpush.msra.mxu0 0.0
    %1635 = vmatpush.msra.mxu0 0.0
    %1636 = vmatpush.msra.mxu0 0.0
    %1637 = vmatpush.msra.mxu0 0.0
    %1638 = vmatpush.msra.mxu0 0.0
    %1639 = vmatpush.msra.mxu0 0.0
    %1640 = vmatpush.msra.mxu0 0.0
    %1641 = vmatpush.msra.mxu0 0.0
    %1642 = vmatpush.msra.mxu0 0.0
    %1643 = vmatpush.msra.mxu0 0.0
    %1644 = vmatpush.msra.mxu0 0.0
    %1645 = vmatpush.msra.mxu0 0.0
    %1646 = vmatpush.msra.mxu0 0.0
    %1647 = vmatpush.msra.mxu0 0.0
    %1648 = vmatpush.msra.mxu0 %v1292
    %1649 = vmatpush.msra.mxu0 %v1291
    %1650 = vmatmul.f32.gmra.mxu0 %v1632
    %v1651 = vpop.f32.mrf.mxu0
    %v1652 = vadd.f32 %v1332, %v1651
    %1653 = vdwg.mxu0
    %v1654 = vadd.f32 %v1324, %v1652
    %v1655 = vxor.u32 %v1654, 2147483648
    %v1656 = vmul.f32 %v1655, 1.442695
    %v1657 = vpow.pop %v1656
    %v1658 = vadd.f32 %v1657, 1.0
    %v1659 = vrcp.pop %v1658
    %v1660 = vmul.f32 %v1658, %v1659
    %v1661 = vsub.f32 1.0, %v1660
    %v1662 = vmul.f32 %v1659, %v1661
    %v1663 = vadd.f32 %v1659, %v1662
    %vm1664 = vweird.f32 %v1658
    %vm1665 = vweird.f32 %v1659
    %vm1666 = vmor %vm1664, %vm1665
    %v1667 = vsel %vm1666, %v1659, %v1663
    %v1668 = vand.u32 2147483647, %v1658
    %vm1669 = vcmp.eq.f32.partialorder %v1668, 8.507059e+37
    %v1670 = vand.u32 %v1658, 2147483648
    %v1671 = vor.u32 1.1754944e-38, %v1670
    %v1672 = vsel %vm1669, %v1671, %v1667
    %v1673 = vmul.f32 1.0, %v1672
    %1675 = vrot.lane.b32.xlu0 %v1652, 96
    %v1676 = vpop.permute.xlu0 %1675
    %v1678 = vmul.f32 %v1673, %v1676
    %1680 = vrot.lane.b32.xlu0 %v1678, 32
    %v1681 = vpop.permute.xlu0 %1680
    %v1683 = vadd.f32 %v1324, %v1681
    %v1684 = vtanh.pop %v1683
    %v1685 = vsub.f32 1.0, %v1673
    %1687 = vrot.lane.b32.xlu0 %v1684, 112
    %v1688 = vpop.permute.xlu0 %1687
    %v1690 = vmul.f32 %v1685, %v1688
    %1691 = vrot.lane.b32.xlu0 %v1630, 16
    %v1692 = vpop.permute.xlu0 %1691
    %v1694 = vmul.f32 %v1673, %v1692
    %v1695 = vadd.f32 %v1690, %v1694
    %vm1696 = vcmp.gt.f32.partialorder %v1331, 16.0
    %v1697 = vsel %vm1696, 1, 0
    %vm1698 = vcmp.eq.s32.totalorder %v1697, 1
    %v1699 = vsel %vm1698, %v1695, %v1692
    %1701 = vrot.lane.b32.xlu0 %v1699, 112
    %v1702 = vpop.permute.xlu0 %1701
    %v1703 = vsel %vm763, %v1702, 0
    %1705 = vmatpush.msra.mxu0 0.0
    %1706 = vmatpush.msra.mxu0 0.0
    %1707 = vmatpush.msra.mxu0 0.0
    %1708 = vmatpush.msra.mxu0 0.0
    %1709 = vmatpush.msra.mxu0 0.0
    %1710 = vmatpush.msra.mxu0 0.0
    %1711 = vmatpush.msra.mxu0 0.0
    %1712 = vmatpush.msra.mxu0 0.0
    %1713 = vmatpush.msra.mxu0 0.0
    %1714 = vmatpush.msra.mxu0 0.0
    %1715 = vmatpush.msra.mxu0 0.0
    %1716 = vmatpush.msra.mxu0 0.0
    %1717 = vmatpush.msra.mxu0 0.0
    %1718 = vmatpush.msra.mxu0 0.0
    %1719 = vmatpush.msra.mxu0 %v1292
    %1720 = vmatpush.msra.mxu0 %v1291
    %1721 = vmatmul.f32.gmra.mxu0 %v1703
    %v1722 = vpop.f32.mrf.mxu0
    %v1723 = vadd.f32 %v1332, %v1722
    %1724 = vdwg.mxu0
    %v1726 = vrot.slane %v1723, 6
    %v1728 = vadd.f32 %v1324, %v1726
    %v1729 = vxor.u32 %v1728, 2147483648
    %v1730 = vmul.f32 %v1729, 1.442695
    %v1731 = vpow.pop %v1730
    %v1732 = vadd.f32 %v1731, 1.0
    %v1733 = vrcp.pop %v1732
    %v1734 = vmul.f32 %v1732, %v1733
    %v1735 = vsub.f32 1.0, %v1734
    %v1736 = vmul.f32 %v1733, %v1735
    %v1737 = vadd.f32 %v1733, %v1736
    %vm1738 = vweird.f32 %v1732
    %vm1739 = vweird.f32 %v1733
    %vm1740 = vmor %vm1738, %vm1739
    %v1741 = vsel %vm1740, %v1733, %v1737
    %v1742 = vand.u32 2147483647, %v1732
    %vm1743 = vcmp.eq.f32.partialorder %v1742, 8.507059e+37
    %v1744 = vand.u32 %v1732, 2147483648
    %v1745 = vor.u32 1.1754944e-38, %v1744
    %v1746 = vsel %vm1743, %v1745, %v1741
    %v1747 = vmul.f32 1.0, %v1746
    %1748 = vrot.lane.b32.xlu0 %v1726, 96
    %v1749 = vpop.permute.xlu0 %1748
    %v1751 = vmul.f32 %v1747, %v1749
    %1753 = vrot.lane.b32.xlu0 %v1751, 32
    %v1754 = vpop.permute.xlu0 %1753
    %v1756 = vadd.f32 %v1324, %v1754
    %v1757 = vtanh.pop %v1756
    %v1758 = vsub.f32 1.0, %v1747
    %1760 = vrot.lane.b32.xlu0 %v1757, 112
    %v1761 = vpop.permute.xlu0 %1760
    %v1763 = vmul.f32 %v1758, %v1761
    %v1764 = vrot.slane %v1699, 6
    %v1766 = vmul.f32 %v1747, %v1764
    %v1767 = vadd.f32 %v1763, %v1766
    %vm1768 = vcmp.gt.f32.partialorder %v1331, 20.0
    %v1769 = vsel %vm1768, 1, 0
    %vm1770 = vcmp.eq.s32.totalorder %v1769, 1
    %v1772 = vrot.slane %v1767, 2
    %1773 = vrot.lane.b32.xlu0 %v1772, 112
    %v1774 = vpop.permute.xlu0 %1773
    %v1777 = vsel %vm1770, %v1774, %v1702
    %v1778 = vld [vmem:[%s2 + $0x1e0] sm:$0x3]
    %v1779 = vld [vmem:[%s2 + $0x1d0] sm:$0xff]
    %v1780 = vld [vmem:[%s2 + $0x1d8] sm:$0xff]
    %v1781 = vperm.slane %v1778, 0
    %v1783 = vsel %vm763, %v1777, 0
    %1785 = vmatpush.msra.mxu0 0.0
    %1786 = vmatpush.msra.mxu0 0.0
    %1787 = vmatpush.msra.mxu0 0.0
    %1788 = vmatpush.msra.mxu0 0.0
    %1789 = vmatpush.msra.mxu0 0.0
    %1790 = vmatpush.msra.mxu0 0.0
    %1791 = vmatpush.msra.mxu0 0.0
    %1792 = vmatpush.msra.mxu0 0.0
    %1793 = vmatpush.msra.mxu0 0.0
    %1794 = vmatpush.msra.mxu0 0.0
    %1795 = vmatpush.msra.mxu0 0.0
    %1796 = vmatpush.msra.mxu0 0.0
    %1797 = vmatpush.msra.mxu0 0.0
    %1798 = vmatpush.msra.mxu0 0.0
    %1799 = vmatpush.msra.mxu0 %v1780
    %1800 = vmatpush.msra.mxu0 %v1779
    %1801 = vmatmul.f32.gmra.mxu0 %v1783
    %v1802 = vpop.f32.mrf.mxu0
    %v1803 = vadd.f32 %v1781, %v1802
    %1804 = vdwg.mxu0
    %v1805 = vld [vmem:[%s2 + $0x1e8] sm:$0xff]
    %v1806 = vld [vmem:[%s2 + $0x1f0] sm:$0xff]
    %v1807 = vld [vmem:[%s2 + $0x1f8] sm:$0xff]
    %v1808 = vld [vmem:[%s2 + $0x200] sm:$0xff]
    %vm1809 = vcmask 261120
    %v1811 = vsel %vm1809, %v1803, 0
    %1813 = vmatpush.msra.mxu0 0.0
    %1814 = vmatpush.msra.mxu0 0.0
    %1815 = vmatpush.msra.mxu0 0.0
    %1816 = vmatpush.msra.mxu0 0.0
    %1817 = vmatpush.msra.mxu0 0.0
    %1818 = vmatpush.msra.mxu0 0.0
    %1819 = vmatpush.msra.mxu0 0.0
    %1820 = vmatpush.msra.mxu0 0.0
    %1821 = vmatpush.msra.mxu0 0.0
    %1822 = vmatpush.msra.mxu0 0.0
    %1823 = vmatpush.msra.mxu0 0.0
    %1824 = vmatpush.msra.mxu0 0.0
    %1825 = vmatpush.msra.mxu0 %v1808
    %1826 = vmatpush.msra.mxu0 %v1807
    %1827 = vmatpush.msra.mxu0 %v1806
    %1828 = vmatpush.msra.mxu0 %v1805
    %1829 = vmatmul.f32.gmra.mxu0 %v1811
    %v1830 = vpop.f32.mrf.mxu0
    %v1831 = vadd.f32 0.0, %v1830
    %1832 = vdwg.mxu0
    %v1833 = vmul.f32 %v1831, 0.17677669
    %vm1834 = vcmask 58368
    %v1835 = vsel %vm1834, %v1833, -inf
    %v1836 = vrot.slane %v1835, 4
    %v1837 = vmax.f32 %v1835, %v1836
    %v1838 = vrot.slane %v1837, 2
    %v1839 = vmax.f32 %v1837, %v1838
    %v1840 = vrot.slane %v1839, 1
    %v1841 = vmax.f32 %v1839, %v1840
    %v1842 = vsub.f32 %v1833, %v1841
    %v1843 = vmul.f32 %v1842, 1.442695
    %v1844 = vpow.pop %v1843
    %v1845 = vsel %vm1834, %v1844, 0.0
    %v1846 = vrot.slane %v1845, 4
    %v1847 = vadd.f32 %v1845, %v1846
    %v1848 = vrot.slane %v1847, 2
    %v1849 = vadd.f32 %v1847, %v1848
    %v1850 = vrot.slane %v1849, 1
    %v1851 = vadd.f32 %v1849, %v1850
    %v1852 = vrcp.pop %v1851
    %v1853 = vmul.f32 %v1851, %v1852
    %v1854 = vsub.f32 1.0, %v1853
    %v1855 = vmul.f32 %v1852, %v1854
    %v1856 = vadd.f32 %v1852, %v1855
    %vm1857 = vweird.f32 %v1851
    %vm1858 = vweird.f32 %v1852
    %vm1859 = vmor %vm1857, %vm1858
    %v1860 = vsel %vm1859, %v1852, %v1856
    %v1861 = vand.u32 2147483647, %v1851
    %vm1862 = vcmp.eq.f32.partialorder %v1861, 8.507059e+37
    %v1863 = vand.u32 %v1851, 2147483648
    %v1864 = vor.u32 1.1754944e-38, %v1863
    %v1865 = vsel %vm1862, %v1864, %v1860
    %v1866 = vmul.f32 %v1844, %v1865
    %v1867 = vld [vmem:[%s2 + $0x208] sm:$0xff]
    %v1869 = vsel %vm158, %v1866, 0
    %1871 = vmatpush.msra.mxu0 0.0
    %1872 = vmatpush.msra.mxu0 0.0
    %1873 = vmatpush.msra.mxu0 0.0
    %1874 = vmatpush.msra.mxu0 0.0
    %1875 = vmatpush.msra.mxu0 0.0
    %1876 = vmatpush.msra.mxu0 0.0
    %1877 = vmatpush.msra.mxu0 0.0
    %1878 = vmatpush.msra.mxu0 0.0
    %1879 = vmatpush.msra.mxu0 0.0
    %1880 = vmatpush.msra.mxu0 0.0
    %1881 = vmatpush.msra.mxu0 0.0
    %1882 = vmatpush.msra.mxu0 0.0
    %1883 = vmatpush.msra.mxu0 0.0
    %1884 = vmatpush.msra.mxu0 0.0
    %1885 = vmatpush.msra.mxu0 0.0
    %1886 = vmatpush.msra.mxu0 %v1867
    %1887 = vmatmul.f32.gmra.mxu0 %v1869
    %v1888 = vpop.f32.mrf.mxu0
    %v1889 = vadd.f32 0.0, %v1888
    %1890 = vdwg.mxu0
    %v1891 = vld [vmem:[%s2 + $0x210] sm:$0xff]
    %v1892 = vld [vmem:[%s2 + $0x218] sm:$0xff]
    %v1893 = vld [vmem:[%s2 + $0x220] sm:$0xff]
    %v1894 = vld [vmem:[%s2 + $0x228] sm:$0xff]
    %v1895 = vperm.slane %v1778, 1
    %v1897 = vsel %vm1809, %v1889, 0
    %1899 = vmatpush.msra.mxu0 0.0
    %1900 = vmatpush.msra.mxu0 0.0
    %1901 = vmatpush.msra.mxu0 0.0
    %1902 = vmatpush.msra.mxu0 0.0
    %1903 = vmatpush.msra.mxu0 0.0
    %1904 = vmatpush.msra.mxu0 0.0
    %1905 = vmatpush.msra.mxu0 0.0
    %1906 = vmatpush.msra.mxu0 0.0
    %1907 = vmatpush.msra.mxu0 0.0
    %1908 = vmatpush.msra.mxu0 0.0
    %1909 = vmatpush.msra.mxu0 0.0
    %1910 = vmatpush.msra.mxu0 0.0
    %1911 = vmatpush.msra.mxu0 %v1894
    %1912 = vmatpush.msra.mxu0 %v1893
    %1913 = vmatpush.msra.mxu0 %v1892
    %1914 = vmatpush.msra.mxu0 %v1891
    %1915 = vmatmul.f32.gmra.mxu0 %v1897
    %v1916 = vpop.f32.mrf.mxu0
    %v1917 = vadd.f32 %v1895, %v1916
    %1918 = vdwg.mxu0
    %vm1919 = vcmask 254976
    %1920 = vst.msk [vmem:[#allocation5] sm:$0x3] %vm1919, %v1917
    // Predicated region
    $region18: #{utterance_level_prosody_encoder.1} parent=1 // pred_check
      _
    $region19: #{utterance_level_prosody_encoder.1} parent=1 // pred_check_branch
      %1922 = sbr.rel (0) target = $region21
    $region20: #{utterance_level_prosody_encoder.1} parent=1 // pred_region
      %1924 = vsyncadd [#allocation3], 0
      %s1926 = sshll.u32 [#allocation5], 4
      %s1927 = int_to_ptr.vmem [resolvable:$true] %s1926
      %s1928 = sshll.u32 %s3, 4
      %s1929 = int_to_ptr.hbm [resolvable:$true] %s1928
      %1931 = dma.vmem_to_hbm [thread:$0]  %s1927, 32, %s1929, [#allocation3]
    $region21: #{utterance_level_prosody_encoder.1} parent=1 // pred_fallthru
      _
    // Predicated region
    $region22: #{utterance_level_prosody_encoder.1} parent=1 // pred_check
      _
    $region23: #{utterance_level_prosody_encoder.1} parent=1 // pred_check_branch
      %1933 = sbr.rel (0) target = $region25
    $region24: #{utterance_level_prosody_encoder.1} parent=1 // pred_region
      %1935 = dma.done [#allocation3], 32
    $region25: #{utterance_level_prosody_encoder.1} parent=1 // pred_fallthru
      _
    %1936 = vsyncpa [#allocation3], 1
    %1937 = vsyncpa [#allocation4], 1

</llo_original>
